<compile_context>
chip_gen: v7x
topology: tpu7x:2x2x1
jax: 0.10.0
libtpu: 0.0.40
codegen_flags: <defaults>
</compile_context>

<pallas_src>
import functools
from typing import NamedTuple

import jax
import jax.numpy as jnp
from jax.experimental import pallas as pl
from jax.experimental.pallas import tpu as pltpu


def _physical_vmem_bytes():
    """Per-TensorCore VMEM capacity; conservative fallback if not queryable."""
    try:
        return int(pltpu.get_tpu_info().vmem_capacity_bytes)
    except Exception:
        return 64 * 1024 * 1024  # v7x per-core size: a safe lower bound everywhere


def _pick_ffn_tile(ffn, desired, align=128):
    """Largest multiple of `align` that divides `ffn` and is <= desired."""
    best = align
    for cand in range(align, min(desired, ffn) + 1, align):
        if ffn % cand == 0:
            best = cand
    return best


def _round_up(v, m):
    return ((v + m - 1) // m) * m


class PhiMoEMLPWeights(NamedTuple):
    w13: jax.Array   # (num_ffn_tiles, H, 2*tf) bf16: per-tile [w1.T | w3.T] columns
    w2t: jax.Array   # (FFN_pad, H)             bf16: transposed down projection
    tf: int
    hidden: int
    ffn: int         # padded FFN


def prepare_phimoe_mlp_weights(w1, w2, w3, *, tf=None,
                               compute_dtype=jnp.bfloat16):
    """One-time weight layout: transpose, cast, and tile-fuse w1/w3.

    Call at parameter-load time (NOT per forward).  w1, w3: (FFN, H);
    w2: (H, FFN) (PyTorch nn.Linear layout).
    """
    ffn, hidden = w1.shape
    assert w3.shape == (ffn, hidden) and w2.shape == (hidden, ffn)

    # Pad FFN to a lane multiple; zero-padded FFN channels contribute exactly 0
    # in both the silu and swiglu branches.
    ffn_pad = _round_up(ffn, 128)
    if tf is None:
        desired = 1024 if _physical_vmem_bytes() >= 96 * 1024 * 1024 else 512
        tf = _pick_ffn_tile(ffn_pad, desired)
    assert ffn_pad % tf == 0 and tf % 128 == 0
    num_tiles = ffn_pad // tf

    w1c = jnp.asarray(w1, compute_dtype)
    w3c = jnp.asarray(w3, compute_dtype)
    w2c = jnp.asarray(w2, compute_dtype)
    if ffn_pad != ffn:
        pad = ffn_pad - ffn
        w1c = jnp.pad(w1c, ((0, pad), (0, 0)))
        w3c = jnp.pad(w3c, ((0, pad), (0, 0)))
        w2c = jnp.pad(w2c, ((0, 0), (0, pad)))

    # (H, FFN) -> (H, num_tiles, tf); fuse gate/value per tile -> (num_tiles, H, 2*tf)
    w1t = w1c.T.reshape(hidden, num_tiles, tf)
    w3t = w3c.T.reshape(hidden, num_tiles, tf)
    w13 = jnp.transpose(jnp.concatenate([w1t, w3t], axis=-1), (1, 0, 2))
    w2t = w2c.T                                          # (FFN_pad, H)
    return PhiMoEMLPWeights(w13=w13, w2t=w2t, tf=tf, hidden=hidden, ffn=ffn_pad)


def _phimoe_mlp_kernel(x_ref, w13_ref, w2_ref, o_ref, acc_ref, *, tf, use_swiglu):
    # grid = (ffn_shards, token_tiles, ffn_steps); axis 2 is the FFN reduction.
    j = pl.program_id(2)

    @pl.when(j == 0)
    def _():
        acc_ref[...] = jnp.zeros_like(acc_ref)

    x = x_ref[...]                                       # (tm, H)     bf16
    gv = jnp.dot(x, w13_ref[...],                        # (tm, 2*tf)  f32 acc
                 preferred_element_type=jnp.float32)
    gate = gv[:, :tf]                                    # lane-aligned split
    value = gv[:, tf:]

    if use_swiglu:
        swiglu_alpha = 1.702
        clamp_limit = 7.0
        gate = jnp.minimum(gate, clamp_limit)            # clamp(max=7)
        value = jnp.clip(value, -clamp_limit, clamp_limit)
        inter = (gate * jax.nn.sigmoid(swiglu_alpha * gate)) * (value + 1.0)
    else:
        inter = (gate * jax.nn.sigmoid(gate)) * value    # silu(w1 x) * (w3 x)

    # Down projection over the FFN tile; intermediate rounded to bf16 for the
    # MXU (documented choice), f32 resident accumulator.
    acc_ref[...] += jnp.dot(inter.astype(w2_ref.dtype), w2_ref[...],
                            preferred_element_type=jnp.float32)

    @pl.when(j == pl.num_programs(2) - 1)
    def _():
        o_ref[...] = acc_ref[...].astype(o_ref.dtype)


def phimoe_mlp_forward(x, weights: PhiMoEMLPWeights, *, use_swiglu=False,
                       num_ffn_shards=1, tm_max=256):
    """x: (T, H).  Returns (T, H) in x.dtype."""
    T, H = x.shape
    assert H == weights.hidden
    tf, FFN = weights.tf, weights.ffn
    num_tiles = FFN // tf
    out_dtype = x.dtype
    compute_dtype = weights.w13.dtype
    cbytes = jnp.dtype(compute_dtype).itemsize

    # FFN-parallel shards (megacore on v7x): each shard reduces a disjoint slice
    # of the FFN axis and writes a partial (T, H) sum -> summed outside.
    if num_tiles % num_ffn_shards != 0:
        num_ffn_shards = 1        # fallback keeps every weight byte read once
    steps = num_tiles // num_ffn_shards

    # Token padding / tiling (bf16 sublane packing = 16 rows).
    sub = max(8, 32 // cbytes)
    if T <= tm_max:
        T_pad = _round_up(T, sub)
        tm = T_pad
    else:
        tm = _round_up(tm_max, sub)
        T_pad = _round_up(T, tm)
    num_t_tiles = T_pad // tm

    xc = x.astype(compute_dtype)
    if T_pad != T:
        xc = jnp.pad(xc, ((0, T_pad - T), (0, 0)))

    partial_dtype = out_dtype if num_ffn_shards == 1 else jnp.float32
    pbytes = jnp.dtype(partial_dtype).itemsize

    # x never changes when there is a single token tile -> single VMEM buffer.
    x_kwargs = {"pipeline_mode": pl.Buffered(1)} if num_t_tiles == 1 else {}
    x_buffers = 1 if num_t_tiles == 1 else 2

    # VMEM budget: actual working set + headroom, capped below physical VMEM.
    physical = _physical_vmem_bytes()
    needed = (tm * H * cbytes * x_buffers            # x buffer(s)
              + 2 * (H * 2 * tf * cbytes)            # fused w13 double-buffer
              + 2 * (tf * H * cbytes)                # w2 double-buffer
              + 2 * (tm * H * pbytes)                # output double-buffer
              + tm * H * 4                           # f32 accumulator
              + (8 << 20))                           # compiler scratch headroom
    vmem_limit = int(min(physical * 85 // 100, max(needed, 32 << 20)))

    cost = pl.CostEstimate(
        flops=int(6 * T_pad * H * FFN),
        transcendentals=int(T_pad * FFN),
        bytes_accessed=int(3 * H * FFN * cbytes
                           + T_pad * H * (x.dtype.itemsize
                                          + num_ffn_shards * pbytes)),
    )

    kernel = functools.partial(_phimoe_mlp_kernel, tf=tf, use_swiglu=use_swiglu)

    partials = pl.pallas_call(
        kernel,
        out_shape=jax.ShapeDtypeStruct((num_ffn_shards, T_pad, H), partial_dtype),
        grid_spec=pltpu.PrefetchScalarGridSpec(
            num_scalar_prefetch=0,
            grid=(num_ffn_shards, num_t_tiles, steps),
            in_specs=[
                # x: resident per token tile.
                pl.BlockSpec((tm, H), lambda s, t, j: (t, 0), **x_kwargs),
                # fused [w1.T | w3.T] tile: one DMA + one MXU dot per step.
                pl.BlockSpec((None, H, 2 * tf),
                             lambda s, t, j: (s * steps + j, 0, 0)),
                # w2.T tile along the FFN reduction.
                pl.BlockSpec((tf, H), lambda s, t, j: (s * steps + j, 0)),
            ],
            out_specs=pl.BlockSpec((None, tm, H), lambda s, t, j: (s, t, 0)),
            scratch_shapes=[pltpu.VMEM((tm, H), jnp.float32)],
        ),
        compiler_params=pltpu.CompilerParams(
            dimension_semantics=("parallel", "parallel", "arbitrary"),
            vmem_limit_bytes=vmem_limit,
        ),
        cost_estimate=cost,
    )(xc, weights.w13, weights.w2t)

    if num_ffn_shards == 1:
        out = partials[0]
    else:
        out = partials.sum(axis=0).astype(out_dtype)
    return out[:T]


def phimoe_block_sparse_top2_mlp(x, w1, w2, w3, *, use_swiglu=False, tf=None,
                                 num_ffn_shards=1, tm_max=256,
                                 compute_dtype=jnp.bfloat16):
    """Convenience one-shot wrapper (re-preps weights each call).

    Production code should call prepare_phimoe_mlp_weights() once at parameter
    load time and phimoe_mlp_forward() per token batch.
    """
    weights = prepare_phimoe_mlp_weights(w1, w2, w3, tf=tf,
                                         compute_dtype=compute_dtype)
    return phimoe_mlp_forward(x, weights, use_swiglu=use_swiglu,
                              num_ffn_shards=num_ffn_shards, tm_max=tm_max)


def _reference(x, w1, w2, w3, use_swiglu, compute_dtype=jnp.bfloat16):
    """Pure-JAX reference mirroring the kernel's bf16 rounding of operands."""
    f32 = jnp.float32
    xc = x.astype(compute_dtype).astype(f32)
    w1c = w1.astype(compute_dtype).astype(f32)
    w2c = w2.astype(compute_dtype).astype(f32)
    w3c = w3.astype(compute_dtype).astype(f32)
    gate = xc @ w1c.T
    value = xc @ w3c.T
    if use_swiglu:
        gate = jnp.minimum(gate, 7.0)
        value = jnp.clip(value, -7.0, 7.0)
        inter = gate * jax.nn.sigmoid(1.702 * gate) * (value + 1.0)
    else:
        inter = gate * jax.nn.sigmoid(gate) * value
    inter = inter.astype(compute_dtype).astype(f32)
    return (inter @ w2c.T).astype(x.dtype)


if __name__ == "__main__":
    # Small shapes consistent with the module (hidden_size / intermediate_size
    # scaled down): 8 tokens, hidden 256, ffn 1024.
    T, H, FFN = 8, 256, 1024

    key = jax.random.PRNGKey(0)
    kx, k1, k2, k3 = jax.random.split(key, 4)
    x = jax.random.normal(kx, (T, H), dtype=jnp.float32)
    w1 = jax.random.normal(k1, (FFN, H), dtype=jnp.float32) * (1.0 / H) ** 0.5
    w3 = jax.random.normal(k3, (FFN, H), dtype=jnp.float32) * (1.0 / H) ** 0.5
    w2 = jax.random.normal(k2, (H, FFN), dtype=jnp.float32) * (1.0 / FFN) ** 0.5

    ok = True
    for use_swiglu in (False, True):
        ref = _reference(x, w1, w2, w3, use_swiglu)
        # Exercise the single-core layout and the FFN-sharded (v7x) layout.
        for num_shards, tf in ((1, 512), (2, 256)):
            weights = prepare_phimoe_mlp_weights(w1, w2, w3, tf=tf)
            out = phimoe_mlp_forward(x, weights, use_swiglu=use_swiglu,
                                     num_ffn_shards=num_shards)
            out = jax.block_until_ready(out)
            if not jnp.allclose(out, ref, atol=2e-2, rtol=2e-2):
                ok = False

    # Prefill-sized T exercises the token-tiling path (tm=256, padded tokens).
    T2 = 300
    x2 = jax.random.normal(kx, (T2, H), dtype=jnp.float32)
    weights = prepare_phimoe_mlp_weights(w1, w2, w3, tf=512)
    ref2 = _reference(x2, w1, w2, w3, False)
    out2 = jax.block_until_ready(
        phimoe_mlp_forward(x2, weights, use_swiglu=False, tm_max=256))
    if not jnp.allclose(out2, ref2, atol=2e-2, rtol=2e-2):
        ok = False

    if ok:
        print("KERNEL_OK")
</pallas_src>

<mosaic_0001>
module attributes {stable_mosaic.version = 11 : i64} {
  func.func @_phimoe_mlp_kernel(%arg0: i32, %arg1: i32, %arg2: i32, %arg3: memref<16x256xbf16, #tpu.memory_space<vmem>>, %arg4: memref<1x256x1024xbf16, #tpu.memory_space<vmem>>, %arg5: memref<512x256xbf16, #tpu.memory_space<vmem>>, %arg6: memref<1x16x256xf32, #tpu.memory_space<vmem>>, %arg7: memref<16x256xf32, #tpu.memory_space<vmem>>) attributes {dimension_semantics = [#tpu.dimension_semantics<parallel>, #tpu.dimension_semantics<parallel>, #tpu.dimension_semantics<arbitrary>], iteration_bounds = array<i64: 1, 1, 2>, scalar_prefetch = 0 : i64, scratch_operands = 1 : i64, tpu.core_type = #tpu.core_type<tc>, window_params = [{pipeline_mode = #tpu.pipeline_mode<synchronous>, transform_indices = @transform_0, window_bounds = array<i64: 16, 256>}, {transform_indices = @transform_1, window_bounds = array<i64: 1, 256, 1024>}, {transform_indices = @transform_2, window_bounds = array<i64: 512, 256>}, {transform_indices = @transform_3, window_bounds = array<i64: 1, 16, 256>}]} {
    %c0_i32 = arith.constant 0 : i32
    %0 = arith.cmpi eq, %arg2, %c0_i32 : i32
    %1 = arith.extui %0 : i1 to i32
    %c0_i32_0 = arith.constant 0 : i32
    %2 = arith.cmpi ne, %1, %c0_i32_0 : i32
    scf.if %2 {
      %cst_14 = arith.constant 0.000000e+00 : f32
      %25 = vector.broadcast %cst_14 : f32 to vector<16x256xf32>
      %c0_15 = arith.constant 0 : index
      %c0_16 = arith.constant 0 : index
      %26 = vector.load %arg7[%c0_15, %c0_16] : memref<16x256xf32, #tpu.memory_space<vmem>>, vector<16x256xf32>
      tpu.vector_store %arg7[%c0_15, %c0_16], %25 {strides = array<i32>} : memref<16x256xf32, #tpu.memory_space<vmem>>, vector<16x256xf32>,
    } else {
    }
    %c0 = arith.constant 0 : index
    %c0_1 = arith.constant 0 : index
    %3 = vector.load %arg3[%c0, %c0_1] : memref<16x256xbf16, #tpu.memory_space<vmem>>, vector<16x256xbf16>
    %c0_2 = arith.constant 0 : index
    %c0_3 = arith.constant 0 : index
    %c0_4 = arith.constant 0 : index
    %4 = vector.load %arg4[%c0_2, %c0_3, %c0_4] : memref<1x256x1024xbf16, #tpu.memory_space<vmem>>, vector<1x256x1024xbf16>
    %5 = vector.shape_cast %4 : vector<1x256x1024xbf16> to vector<256x1024xbf16>
    %cst = arith.constant dense<0.000000e+00> : vector<16x1024xf32>
    %6 = tpu.matmul %3, %5, %cst {dimension_numbers = #tpu.dot_dimension_numbers<[1], [0], [0], [1], [0, 0, 1, 1], [], []>} : vector<16x256xbf16>, vector<256x1024xbf16>, vector<16x1024xf32> -> vector<16x1024xf32>
    %7 = vector.extract_strided_slice %6 {offsets = [0, 0], sizes = [16, 512], strides = [1, 1]} : vector<16x1024xf32> to vector<16x512xf32>
    %8 = vector.extract_strided_slice %6 {offsets = [0, 512], sizes = [16, 512], strides = [1, 1]} : vector<16x1024xf32> to vector<16x512xf32>
    %9 = arith.negf %7 : vector<16x512xf32>
    %10 = math.exp %9 : vector<16x512xf32>
    %cst_5 = arith.constant 1.000000e+00 : f32
    %11 = vector.broadcast %cst_5 : f32 to vector<16x512xf32>
    %12 = arith.addf %11, %10 : vector<16x512xf32>
    %13 = arith.divf %11, %12 : vector<16x512xf32>
    %14 = arith.mulf %7, %13 : vector<16x512xf32>
    %15 = arith.mulf %14, %8 : vector<16x512xf32>
    %c0_6 = arith.constant 0 : index
    %c0_7 = arith.constant 0 : index
    %16 = vector.load %arg7[%c0_6, %c0_7] : memref<16x256xf32, #tpu.memory_space<vmem>>, vector<16x256xf32>
    %17 = arith.truncf %15 : vector<16x512xf32> to vector<16x512xbf16>
    %c0_8 = arith.constant 0 : index
    %c0_9 = arith.constant 0 : index
    %18 = vector.load %arg5[%c0_8, %c0_9] : memref<512x256xbf16, #tpu.memory_space<vmem>>, vector<512x256xbf16>
    %cst_10 = arith.constant dense<0.000000e+00> : vector<16x256xf32>
    %19 = tpu.matmul %17, %18, %cst_10 {dimension_numbers = #tpu.dot_dimension_numbers<[1], [0], [0], [1], [0, 0, 1, 1], [], []>} : vector<16x512xbf16>, vector<512x256xbf16>, vector<16x256xf32> -> vector<16x256xf32>
    %20 = arith.addf %16, %19 : vector<16x256xf32>
    %c0_11 = arith.constant 0 : index
    %c0_12 = arith.constant 0 : index
    %21 = vector.load %arg7[%c0_11, %c0_12] : memref<16x256xf32, #tpu.memory_space<vmem>>, vector<16x256xf32>
    tpu.vector_store %arg7[%c0_11, %c0_12], %20 {strides = array<i32>} : memref<16x256xf32, #tpu.memory_space<vmem>>, vector<16x256xf32>,
    %c1_i32 = arith.constant 1 : i32
    %22 = arith.cmpi eq, %arg2, %c1_i32 : i32
    %23 = arith.extui %22 : i1 to i32
    %c0_i32_13 = arith.constant 0 : i32
    %24 = arith.cmpi ne, %23, %c0_i32_13 : i32
    scf.if %24 {
      %c0_14 = arith.constant 0 : index
      %c0_15 = arith.constant 0 : index
      %25 = vector.load %arg7[%c0_14, %c0_15] : memref<16x256xf32, #tpu.memory_space<vmem>>, vector<16x256xf32>
      %c0_16 = arith.constant 0 : index
      %c0_17 = arith.constant 0 : index
      %c0_18 = arith.constant 0 : index
      %26 = vector.load %arg6[%c0_16, %c0_17, %c0_18] : memref<1x16x256xf32, #tpu.memory_space<vmem>>, vector<1x16x256xf32>
      %27 = vector.shape_cast %26 : vector<1x16x256xf32> to vector<16x256xf32>
      %28 = vector.shape_cast %25 : vector<16x256xf32> to vector<1x16x256xf32>
      tpu.vector_store %arg6[%c0_16, %c0_17, %c0_18], %28 {strides = array<i32>} : memref<1x16x256xf32, #tpu.memory_space<vmem>>, vector<1x16x256xf32>,
    } else {
    }
    return
  }
  func.func @transform_0(%arg0: i32, %arg1: i32, %arg2: i32) -> (i32, i32) {
    %c0_i32 = arith.constant 0 : i32
    %c0_i32_0 = arith.constant 0 : i32
    return %arg1, %c0_i32 : i32, i32
  }
  func.func @transform_1(%arg0: i32, %arg1: i32, %arg2: i32) -> (i32, i32, i32) {
    %c2_i32 = arith.constant 2 : i32
    %0 = arith.muli %arg0, %c2_i32 : i32
    %1 = arith.addi %0, %arg2 : i32
    %c0_i32 = arith.constant 0 : i32
    %c0_i32_0 = arith.constant 0 : i32
    %c0_i32_1 = arith.constant 0 : i32
    return %1, %c0_i32, %c0_i32_0 : i32, i32, i32
  }
  func.func @transform_2(%arg0: i32, %arg1: i32, %arg2: i32) -> (i32, i32) {
    %c2_i32 = arith.constant 2 : i32
    %0 = arith.muli %arg0, %c2_i32 : i32
    %1 = arith.addi %0, %arg2 : i32
    %c0_i32 = arith.constant 0 : i32
    %c0_i32_0 = arith.constant 0 : i32
    return %1, %c0_i32 : i32, i32
  }
  func.func @transform_3(%arg0: i32, %arg1: i32, %arg2: i32) -> (i32, i32, i32) {
    %c0_i32 = arith.constant 0 : i32
    %c0_i32_0 = arith.constant 0 : i32
    return %arg0, %arg1, %c0_i32 : i32, i32, i32
  }
}

</mosaic_0001>

<llo_original>
// kernel: tpu_custom_call.1
$region0: #{tpu_custom_call.1}
  #allocation0 [shape = 'u32[]', space=smem, size = 0x4, offset = 0x4, fixed_abs, tag = 'smem constant byte address 0x4 - core index']
  #allocation1 [shape = 'u32[144,128]{1,0:T(1,128)}', space=vmem, size = 0x12000, scoped, tag = 'internal scratch']
  #allocation2 [shape = 'f32[16,256]{1,0:T(8,128)}', space=vmem, size = 0x4000, scoped, tag = 'scratch operand']
  %s0 = inlined_call_operand.hbm [shape: bf16[16,256], index: 0, kind: input, shape index: {}]
  %s1 = inlined_call_operand.hbm [shape: bf16[2,256,1024], index: 1, kind: input, shape index: {}]
  %s2 = inlined_call_operand.hbm [shape: bf16[1024,256], index: 2, kind: input, shape index: {}]
  %s3 = inlined_call_operand.hbm [shape: f32[1,16,256], index: 3, kind: output, shape index: {}]
  %s4 = sld [smem:[#allocation0]]
  $region65: #{tpu_custom_call.1} parent=0
    _
  %s6 = ssub.s32 1, %s4
  %s7 = scalar_select 0, %s6, %s4
  $region1: #{tpu_custom_call.1} parent=0
    #allocation3 [shape = 'u8[8192]{0}', space=vmem, size = 0x2000, scoped, tag = 'input window, operand 0, single buffered']
    #allocation4 [shape = 's32[2]{0}', space=sflag, size = 0x8, scoped, tag = 'scoped memory for tpu_custom_call.1']
    #allocation5 [shape = 's32[2]{0}', space=sflag, size = 0x8, scoped, tag = 'scoped memory for tpu_custom_call.1']
    #allocation6 [shape = 'u8[1048576]{0}', space=vmem, size = 0x100000, scoped, tag = 'input window, operand 1']
    #allocation7 [shape = 's32[2]{0}', space=sflag, size = 0x8, scoped, tag = 'scoped memory for tpu_custom_call.1']
    #allocation8 [shape = 'u8[524288]{0}', space=vmem, size = 0x80000, scoped, tag = 'input window, operand 2']
    #allocation9 [shape = 'u8[16384]{0}', space=vmem, size = 0x4000, scoped, tag = 'output window, operand 0, single buffered']
    %8 = vsyncpa [#allocation4], 0
    %9 = vsyncpa [#allocation7], 0
    %s10 = scalar_lea.sflag [#allocation7], 1
    %11 = vsyncpa %s10, 0
    %12 = vsyncpa [#allocation5], 0
    loop: start=0, step=1, limit=4
    $region2: #{tpu_custom_call.1} parent=1 // loop_pre_header
      _
    $region3: #{tpu_custom_call.1} parent=1 // loop_header
      %s14 = sphi 0, %s18
      %p15 = scmp.ge.s32.totalorder %s14, 4
      %s21 = sphi 0, %s40
      %s22 = sphi 0, %s36
      %s23 = sphi 0, %s32
      %s24 = sphi 0, %s21
      %s25 = sphi 0, %s22
      %s26 = sphi 0, %s23
      %s27 = sphi 0, %s24
      %s28 = sphi 0, %s25
      %s29 = sphi 0, %s26
      %s43 = sphi 0, %s45
      %s46 = sphi 0, %s43
      %s47 = sphi 0, %s46
      %s63 = sphi 0, %s47
      %s73 = sphi 0, %s75
      %s76 = sphi 0, %s73
      %s77 = sphi 0, %s76
      %s93 = sphi 0, %s77
      %s103 = sphi 0, %s105
      %s106 = sphi 0, %s103
      %s107 = sphi 0, %s106
      %s123 = sphi 0, %s107
      %s131 = sphi 0, %s133
      %s134 = sphi 0, %s131
      %s135 = sphi 0, %s134
      %s151 = sphi 0, %s135
    $region4: #{tpu_custom_call.1} parent=1 // loop_header_branch
      %17 = sbr.rel (%p15) target = $region8
    $region5: #{tpu_custom_call.1} parent=1 // loop_body
      %s19 = ssub.s32 %s14, 1
      %s20 = ssub.s32 %s14, 2
      %s30 = sadd.s32 1, %s23
      %p31 = scmp.ge.s32.totalorder %s30, 2
      %s32 = scalar_select %p31, 0, %s30
      %s33 = sadd.s32 1, %s22
      %s34 = scalar_select %p31, %s33, %s22
      %p35 = scmp.ge.s32.totalorder %s34, 1
      %s36 = scalar_select %p35, 0, %s34
      %s37 = sadd.s32 1, %s21
      %s38 = scalar_select %p35, %s37, %s21
      %p39 = scmp.ge.s32.totalorder %s38, 1
      %s40 = scalar_select %p39, 0, %s38
      %s41 = ssub.s32 %s22, %s36
      %p42 = scmp.eq.s32.totalorder %s41, 0
      %s44 = sadd.s32 %s43, 1
      %s45 = scalar_select %p42, %s43, %s44
      %p48 = pneg %p42
      %p49 = scmp.eq.s32.totalorder %s14, 1
      %p50 = por %p48, %p49
      %p51 = scmp.ne.s32.totalorder %s43, %s46
      %p52 = scmp.eq.s32.totalorder %s14, 0
      %p53 = por %p51, %p52
      %p54 = scmp.ne.s32.totalorder %s43, %s46
      %p55 = scmp.eq.s32.totalorder %s19, 1
      %p56 = por %p54, %p55
      %p57 = scmp.ne.s32.totalorder %s46, %s47
      %p58 = scmp.eq.s32.totalorder %s19, 0
      %p59 = por %p57, %p58
      %p60 = scmp.ne.s32.totalorder %s46, %s47
      %p61 = scmp.eq.s32.totalorder %s20, 1
      %p62 = por %p60, %p61
      %p64 = scmp.ne.s32.totalorder %s47, %s63
      %p65 = scmp.eq.s32.totalorder %s20, 0
      %p66 = por %p64, %p65
      %s67 = smul.u32 %s21, 2
      %s68 = sadd.s32 %s67, %s23
      %s69 = smul.u32 %s40, 2
      %s70 = sadd.s32 %s69, %s32
      %s71 = ssub.s32 %s68, %s70
      %p72 = scmp.eq.s32.totalorder %s71, 0
      %s74 = sadd.s32 %s73, 1
      %s75 = scalar_select %p72, %s73, %s74
      %p78 = pneg %p72
      %p79 = scmp.eq.s32.totalorder %s14, 1
      %p80 = por %p78, %p79
      %p81 = scmp.ne.s32.totalorder %s73, %s76
      %p82 = scmp.eq.s32.totalorder %s14, 0
      %p83 = por %p81, %p82
      %p84 = scmp.ne.s32.totalorder %s73, %s76
      %p85 = scmp.eq.s32.totalorder %s19, 1
      %p86 = por %p84, %p85
      %p87 = scmp.ne.s32.totalorder %s76, %s77
      %p88 = scmp.eq.s32.totalorder %s19, 0
      %p89 = por %p87, %p88
      %p90 = scmp.ne.s32.totalorder %s76, %s77
      %p91 = scmp.eq.s32.totalorder %s20, 1
      %p92 = por %p90, %p91
      %p94 = scmp.ne.s32.totalorder %s77, %s93
      %p95 = scmp.eq.s32.totalorder %s20, 0
      %p96 = por %p94, %p95
      %s97 = smul.u32 %s21, 2
      %s98 = sadd.s32 %s97, %s23
      %s99 = smul.u32 %s40, 2
      %s100 = sadd.s32 %s99, %s32
      %s101 = ssub.s32 %s98, %s100
      %p102 = scmp.eq.s32.totalorder %s101, 0
      %s104 = sadd.s32 %s103, 1
      %s105 = scalar_select %p102, %s103, %s104
      %p108 = pneg %p102
      %p109 = scmp.eq.s32.totalorder %s14, 1
      %p110 = por %p108, %p109
      %p111 = scmp.ne.s32.totalorder %s103, %s106
      %p112 = scmp.eq.s32.totalorder %s14, 0
      %p113 = por %p111, %p112
      %p114 = scmp.ne.s32.totalorder %s103, %s106
      %p115 = scmp.eq.s32.totalorder %s19, 1
      %p116 = por %p114, %p115
      %p117 = scmp.ne.s32.totalorder %s106, %s107
      %p118 = scmp.eq.s32.totalorder %s19, 0
      %p119 = por %p117, %p118
      %p120 = scmp.ne.s32.totalorder %s106, %s107
      %p121 = scmp.eq.s32.totalorder %s20, 1
      %p122 = por %p120, %p121
      %p124 = scmp.ne.s32.totalorder %s107, %s123
      %p125 = scmp.eq.s32.totalorder %s20, 0
      %p126 = por %p124, %p125
      %s127 = ssub.s32 %s21, %s40
      %s128 = ssub.s32 %s22, %s36
      %s129 = sor.u32 %s127, %s128
      %p130 = scmp.eq.s32.totalorder %s129, 0
      %s132 = sadd.s32 %s131, 1
      %s133 = scalar_select %p130, %s131, %s132
      %p136 = pneg %p130
      %p137 = scmp.eq.s32.totalorder %s14, 1
      %p138 = por %p136, %p137
      %p139 = scmp.ne.s32.totalorder %s131, %s134
      %p140 = scmp.eq.s32.totalorder %s14, 0
      %p141 = por %p139, %p140
      %p142 = scmp.ne.s32.totalorder %s131, %s134
      %p143 = scmp.eq.s32.totalorder %s19, 1
      %p144 = por %p142, %p143
      %p145 = scmp.ne.s32.totalorder %s134, %s135
      %p146 = scmp.eq.s32.totalorder %s19, 0
      %p147 = por %p145, %p146
      %p148 = scmp.ne.s32.totalorder %s134, %s135
      %p149 = scmp.eq.s32.totalorder %s20, 1
      %p150 = por %p148, %p149
      %p152 = scmp.ne.s32.totalorder %s135, %s151
      %p153 = scmp.eq.s32.totalorder %s20, 0
      %p154 = por %p152, %p153
      %p155 = scmp.le.s32.totalorder 1, %s14
      %p156 = scmp.lt.s32.totalorder %s14, 3
      %p157 = pnand %p155, %p156
      %p158 = pneg %p157
      // Predicated region
      $region9: #{tpu_custom_call.1} parent=5 // pred_check
        _
      $region10: #{tpu_custom_call.1} parent=5 // pred_check_branch
        %160 = sbr.rel (%p157) target = $region12
      $region11: #{tpu_custom_call.1} parent=5 // pred_region
        %s161 = ssub.s32 %s14, 1
        // Predicated region
        $region13: #{tpu_custom_call.1} parent=11 // pred_check
          %p162 = pneg %p59
        $region14: #{tpu_custom_call.1} parent=11 // pred_check_branch
          %164 = sbr.rel (%p162) target = $region16
        $region15: #{tpu_custom_call.1} parent=11 // pred_region
          %s165 = smul.u32 2, %s25
          %s167 = ssub.s32 256, 256
          %168 = vsyncadd [#allocation4], %s167
          %s169 = smul.addr %s165, 2
          %s170 = smul.addr %s169, 64
          %s171 = scalar_lea.hbm %s0, %s170
          %s172 = sshll.u32 [#allocation3], 4
          %s173 = int_to_ptr.vmem [resolvable:$true] %s172
          %178 = dma.hbm_to_vmem [thread:$0]  %s171, 256, %s173, [#allocation4], 128, 128, 8
        $region16: #{tpu_custom_call.1} parent=11 // pred_fallthru
          _
      $region12: #{tpu_custom_call.1} parent=5 // pred_fallthru
        _
      %p179 = scmp.lt.s32.totalorder %s14, 2
      // Predicated region
      $region17: #{tpu_custom_call.1} parent=5 // pred_check
        %p180 = pneg %p179
      $region18: #{tpu_custom_call.1} parent=5 // pred_check_branch
        %182 = sbr.rel (%p180) target = $region20
      $region19: #{tpu_custom_call.1} parent=5 // pred_region
        // Predicated region
        $region21: #{tpu_custom_call.1} parent=19 // pred_check
          %p183 = pneg %p83
        $region22: #{tpu_custom_call.1} parent=19 // pred_check_branch
          %185 = sbr.rel (%p183) target = $region24
        $region23: #{tpu_custom_call.1} parent=19 // pred_region
          %s186 = sand.u32 %s14, 1
          %s187 = scalar_lea.sflag [#allocation7], %s186
          %s188 = sand.u32 %s73, 1
          %s189 = smul.addr %s188, 1024
          %s190 = scalar_lea.vmem [#allocation6], %s189
          %s191 = smul.u32 %s21, 2
          %s192 = sadd.s32 %s191, %s23
          %s194 = ssub.s32 16384, 16384
          %195 = vsyncadd %s187, %s194
          %s196 = smul.addr %s192, 256
          %s197 = smul.addr %s196, 64
          %s198 = scalar_lea.hbm %s1, %s197
          %s199 = sshll.u32 %s190, 4
          %s200 = int_to_ptr.vmem [resolvable:$true] %s199
          %205 = dma.hbm_to_vmem [thread:$0]  %s198, 16384, %s200, %s187, 512, 512, 32
        $region24: #{tpu_custom_call.1} parent=19 // pred_fallthru
          _
        // Predicated region
        $region25: #{tpu_custom_call.1} parent=19 // pred_check
          %p206 = pneg %p113
        $region26: #{tpu_custom_call.1} parent=19 // pred_check_branch
          %208 = sbr.rel (%p206) target = $region28
        $region27: #{tpu_custom_call.1} parent=19 // pred_region
          %s209 = sand.u32 %s14, 1
          %s210 = scalar_lea.sflag [#allocation7], %s209
          %s211 = sand.u32 %s103, 1
          %s212 = smul.addr %s211, 512
          %s213 = scalar_lea.vmem [#allocation8], %s212
          %s214 = smul.u32 %s21, 2
          %s215 = sadd.s32 %s214, %s23
          %s216 = smul.u32 64, %s215
          %s218 = ssub.s32 8192, 8192
          %219 = vsyncadd %s210, %s218
          %s220 = smul.addr %s216, 2
          %s221 = smul.addr %s220, 64
          %s222 = scalar_lea.hbm %s2, %s221
          %s223 = sshll.u32 %s213, 4
          %s224 = int_to_ptr.vmem [resolvable:$true] %s223
          %229 = dma.hbm_to_vmem [thread:$0]  %s222, 8192, %s224, %s210, 128, 128, 8
        $region28: #{tpu_custom_call.1} parent=19 // pred_fallthru
          _
      $region20: #{tpu_custom_call.1} parent=5 // pred_fallthru
        _
      %p230 = scmp.le.s32.totalorder 1, %s14
      %p231 = scmp.lt.s32.totalorder %s14, 3
      %p232 = pnand %p230, %p231
      %p233 = pneg %p232
      // Predicated region
      $region29: #{tpu_custom_call.1} parent=5 // pred_check
        _
      $region30: #{tpu_custom_call.1} parent=5 // pred_check_branch
        %235 = sbr.rel (%p232) target = $region32
      $region31: #{tpu_custom_call.1} parent=5 // pred_region
        %s236 = ssub.s32 %s14, 1
        // Predicated region
        $region33: #{tpu_custom_call.1} parent=31 // pred_check
          %p237 = pneg %p59
        $region34: #{tpu_custom_call.1} parent=31 // pred_check_branch
          %239 = sbr.rel (%p237) target = $region36
        $region35: #{tpu_custom_call.1} parent=31 // pred_region
          %240 = dma.done [#allocation4], 256
        $region36: #{tpu_custom_call.1} parent=31 // pred_fallthru
          _
        %s241 = sand.u32 %s19, 1
        %s242 = scalar_lea.sflag [#allocation7], %s241
        %s243 = sand.u32 %s76, 1
        %s244 = smul.addr %s243, 1024
        %s245 = scalar_lea.vmem [#allocation6], %s244
        // Predicated region
        $region37: #{tpu_custom_call.1} parent=31 // pred_check
          %p246 = pneg %p89
        $region38: #{tpu_custom_call.1} parent=31 // pred_check_branch
          %248 = sbr.rel (%p246) target = $region40
        $region39: #{tpu_custom_call.1} parent=31 // pred_region
          %249 = dma.done %s242, 16384
        $region40: #{tpu_custom_call.1} parent=31 // pred_fallthru
          _
        %s250 = sand.u32 %s19, 1
        %s251 = scalar_lea.sflag [#allocation7], %s250
        %s252 = sand.u32 %s106, 1
        %s253 = smul.addr %s252, 512
        %s254 = scalar_lea.vmem [#allocation8], %s253
        // Predicated region
        $region41: #{tpu_custom_call.1} parent=31 // pred_check
          %p255 = pneg %p119
        $region42: #{tpu_custom_call.1} parent=31 // pred_check_branch
          %257 = sbr.rel (%p255) target = $region44
        $region43: #{tpu_custom_call.1} parent=31 // pred_region
          %258 = dma.done %s251, 8192
        $region44: #{tpu_custom_call.1} parent=31 // pred_fallthru
          _
        %p259 = pneg %p59
        %p260 = pneg %p56
        %s261 = sand.u32 %s19, 1
        %s262 = scalar_lea.sflag [#allocation7], %s261
        %s263 = sand.u32 %s76, 1
        %s264 = smul.addr %s263, 1024
        %s265 = scalar_lea.vmem [#allocation6], %s264
        %p266 = pneg %p89
        %p267 = pneg %p86
        %s268 = sand.u32 %s19, 1
        %s269 = scalar_lea.sflag [#allocation7], %s268
        %s270 = sand.u32 %s106, 1
        %s271 = smul.addr %s270, 512
        %s272 = scalar_lea.vmem [#allocation8], %s271
        %p273 = pneg %p119
        %p274 = pneg %p116
        %p275 = pneg %p147
        %p276 = pneg %p144
        %s277 = smul.u32 2, %s25
        %s278 = smul.u32 %s24, 2
        %s279 = sadd.s32 %s278, %s26
        %s280 = smul.u32 %s24, 2
        %s281 = sadd.s32 %s280, %s26
        %s282 = smul.u32 64, %s281
        %s283 = smul.u32 2, %s25
        %p284 = scmp.eq.s32.totalorder %s26, 0
        // Predicated region
        $region45: #{tpu_custom_call.1} parent=31 // pred_check
          %p285 = pneg %p284
        $region46: #{tpu_custom_call.1} parent=31 // pred_check_branch
          %287 = sbr.rel (%p285) target = $region48
        $region47: #{tpu_custom_call.1} parent=31 // pred_region
          %288 = vst [vmem:[#allocation2] sm:$0xff] 0.0
          %289 = vst [vmem:[#allocation2 + $0x8] sm:$0xff] 0.0
          %290 = vst [vmem:[#allocation2 + $0x10] sm:$0xff] 0.0
          %291 = vst [vmem:[#allocation2 + $0x18] sm:$0xff] 0.0
        $region48: #{tpu_custom_call.1} parent=31 // pred_fallthru
          _
        %v292 = vld [vmem:[#allocation3] sm:$0xff]
        %v293 = vld [vmem:[#allocation3 + $0x8] sm:$0xff]
        %v294 = vld [vmem:[%s245] sm:$0xff]
        %v295 = vld [vmem:[%s245 + $0x8] sm:$0xff]
        %v296 = vld [vmem:[%s245 + $0x10] sm:$0xff]
        %v297 = vld [vmem:[%s245 + $0x18] sm:$0xff]
        %v298 = vld [vmem:[%s245 + $0x20] sm:$0xff]
        %v299 = vld [vmem:[%s245 + $0x28] sm:$0xff]
        %v300 = vld [vmem:[%s245 + $0x30] sm:$0xff]
        %v301 = vld [vmem:[%s245 + $0x38] sm:$0xff]
        %v302 = vld [vmem:[%s245 + $0x40] sm:$0xff]
        %v303 = vld [vmem:[%s245 + $0x48] sm:$0xff]
        %v304 = vld [vmem:[%s245 + $0x50] sm:$0xff]
        %v305 = vld [vmem:[%s245 + $0x58] sm:$0xff]
        %v306 = vld [vmem:[%s245 + $0x60] sm:$0xff]
        %v307 = vld [vmem:[%s245 + $0x68] sm:$0xff]
        %v308 = vld [vmem:[%s245 + $0x70] sm:$0xff]
        %v309 = vld [vmem:[%s245 + $0x78] sm:$0xff]
        %v310 = vld [vmem:[%s245 + $0x80] sm:$0xff]
        %v311 = vld [vmem:[%s245 + $0x88] sm:$0xff]
        %v312 = vld [vmem:[%s245 + $0x90] sm:$0xff]
        %v313 = vld [vmem:[%s245 + $0x98] sm:$0xff]
        %v314 = vld [vmem:[%s245 + $0xa0] sm:$0xff]
        %v315 = vld [vmem:[%s245 + $0xa8] sm:$0xff]
        %v316 = vld [vmem:[%s245 + $0xb0] sm:$0xff]
        %v317 = vld [vmem:[%s245 + $0xb8] sm:$0xff]
        %v318 = vld [vmem:[%s245 + $0xc0] sm:$0xff]
        %v319 = vld [vmem:[%s245 + $0xc8] sm:$0xff]
        %v320 = vld [vmem:[%s245 + $0xd0] sm:$0xff]
        %v321 = vld [vmem:[%s245 + $0xd8] sm:$0xff]
        %v322 = vld [vmem:[%s245 + $0xe0] sm:$0xff]
        %v323 = vld [vmem:[%s245 + $0xe8] sm:$0xff]
        %v324 = vld [vmem:[%s245 + $0xf0] sm:$0xff]
        %v325 = vld [vmem:[%s245 + $0xf8] sm:$0xff]
        %v326 = vld [vmem:[%s245 + $0x100] sm:$0xff]
        %v327 = vld [vmem:[%s245 + $0x108] sm:$0xff]
        %v328 = vld [vmem:[%s245 + $0x110] sm:$0xff]
        %v329 = vld [vmem:[%s245 + $0x118] sm:$0xff]
        %v330 = vld [vmem:[%s245 + $0x120] sm:$0xff]
        %v331 = vld [vmem:[%s245 + $0x128] sm:$0xff]
        %v332 = vld [vmem:[%s245 + $0x130] sm:$0xff]
        %v333 = vld [vmem:[%s245 + $0x138] sm:$0xff]
        %v334 = vld [vmem:[%s245 + $0x140] sm:$0xff]
        %v335 = vld [vmem:[%s245 + $0x148] sm:$0xff]
        %v336 = vld [vmem:[%s245 + $0x150] sm:$0xff]
        %v337 = vld [vmem:[%s245 + $0x158] sm:$0xff]
        %v338 = vld [vmem:[%s245 + $0x160] sm:$0xff]
        %v339 = vld [vmem:[%s245 + $0x168] sm:$0xff]
        %v340 = vld [vmem:[%s245 + $0x170] sm:$0xff]
        %v341 = vld [vmem:[%s245 + $0x178] sm:$0xff]
        %v342 = vld [vmem:[%s245 + $0x180] sm:$0xff]
        %v343 = vld [vmem:[%s245 + $0x188] sm:$0xff]
        %v344 = vld [vmem:[%s245 + $0x190] sm:$0xff]
        %v345 = vld [vmem:[%s245 + $0x198] sm:$0xff]
        %v346 = vld [vmem:[%s245 + $0x1a0] sm:$0xff]
        %v347 = vld [vmem:[%s245 + $0x1a8] sm:$0xff]
        %v348 = vld [vmem:[%s245 + $0x1b0] sm:$0xff]
        %v349 = vld [vmem:[%s245 + $0x1b8] sm:$0xff]
        %v350 = vld [vmem:[%s245 + $0x1c0] sm:$0xff]
        %v351 = vld [vmem:[%s245 + $0x1c8] sm:$0xff]
        %v352 = vld [vmem:[%s245 + $0x1d0] sm:$0xff]
        %v353 = vld [vmem:[%s245 + $0x1d8] sm:$0xff]
        %v354 = vld [vmem:[%s245 + $0x1e0] sm:$0xff]
        %v355 = vld [vmem:[%s245 + $0x1e8] sm:$0xff]
        %v356 = vld [vmem:[%s245 + $0x1f0] sm:$0xff]
        %v357 = vld [vmem:[%s245 + $0x1f8] sm:$0xff]
        %v358 = vld [vmem:[%s245 + $0x200] sm:$0xff]
        %v359 = vld [vmem:[%s245 + $0x208] sm:$0xff]
        %v360 = vld [vmem:[%s245 + $0x210] sm:$0xff]
        %v361 = vld [vmem:[%s245 + $0x218] sm:$0xff]
        %v362 = vld [vmem:[%s245 + $0x220] sm:$0xff]
        %v363 = vld [vmem:[%s245 + $0x228] sm:$0xff]
        %v364 = vld [vmem:[%s245 + $0x230] sm:$0xff]
        %v365 = vld [vmem:[%s245 + $0x238] sm:$0xff]
        %v366 = vld [vmem:[%s245 + $0x240] sm:$0xff]
        %v367 = vld [vmem:[%s245 + $0x248] sm:$0xff]
        %v368 = vld [vmem:[%s245 + $0x250] sm:$0xff]
        %v369 = vld [vmem:[%s245 + $0x258] sm:$0xff]
        %v370 = vld [vmem:[%s245 + $0x260] sm:$0xff]
        %v371 = vld [vmem:[%s245 + $0x268] sm:$0xff]
        %v372 = vld [vmem:[%s245 + $0x270] sm:$0xff]
        %v373 = vld [vmem:[%s245 + $0x278] sm:$0xff]
        %v374 = vld [vmem:[%s245 + $0x280] sm:$0xff]
        %v375 = vld [vmem:[%s245 + $0x288] sm:$0xff]
        %v376 = vld [vmem:[%s245 + $0x290] sm:$0xff]
        %v377 = vld [vmem:[%s245 + $0x298] sm:$0xff]
        %v378 = vld [vmem:[%s245 + $0x2a0] sm:$0xff]
        %v379 = vld [vmem:[%s245 + $0x2a8] sm:$0xff]
        %v380 = vld [vmem:[%s245 + $0x2b0] sm:$0xff]
        %v381 = vld [vmem:[%s245 + $0x2b8] sm:$0xff]
        %v382 = vld [vmem:[%s245 + $0x2c0] sm:$0xff]
        %v383 = vld [vmem:[%s245 + $0x2c8] sm:$0xff]
        %v384 = vld [vmem:[%s245 + $0x2d0] sm:$0xff]
        %v385 = vld [vmem:[%s245 + $0x2d8] sm:$0xff]
        %v386 = vld [vmem:[%s245 + $0x2e0] sm:$0xff]
        %v387 = vld [vmem:[%s245 + $0x2e8] sm:$0xff]
        %v388 = vld [vmem:[%s245 + $0x2f0] sm:$0xff]
        %v389 = vld [vmem:[%s245 + $0x2f8] sm:$0xff]
        %v390 = vld [vmem:[%s245 + $0x300] sm:$0xff]
        %v391 = vld [vmem:[%s245 + $0x308] sm:$0xff]
        %v392 = vld [vmem:[%s245 + $0x310] sm:$0xff]
        %v393 = vld [vmem:[%s245 + $0x318] sm:$0xff]
        %v394 = vld [vmem:[%s245 + $0x320] sm:$0xff]
        %v395 = vld [vmem:[%s245 + $0x328] sm:$0xff]
        %v396 = vld [vmem:[%s245 + $0x330] sm:$0xff]
        %v397 = vld [vmem:[%s245 + $0x338] sm:$0xff]
        %v398 = vld [vmem:[%s245 + $0x340] sm:$0xff]
        %v399 = vld [vmem:[%s245 + $0x348] sm:$0xff]
        %v400 = vld [vmem:[%s245 + $0x350] sm:$0xff]
        %v401 = vld [vmem:[%s245 + $0x358] sm:$0xff]
        %v402 = vld [vmem:[%s245 + $0x360] sm:$0xff]
        %v403 = vld [vmem:[%s245 + $0x368] sm:$0xff]
        %v404 = vld [vmem:[%s245 + $0x370] sm:$0xff]
        %v405 = vld [vmem:[%s245 + $0x378] sm:$0xff]
        %v406 = vld [vmem:[%s245 + $0x380] sm:$0xff]
        %v407 = vld [vmem:[%s245 + $0x388] sm:$0xff]
        %v408 = vld [vmem:[%s245 + $0x390] sm:$0xff]
        %v409 = vld [vmem:[%s245 + $0x398] sm:$0xff]
        %v410 = vld [vmem:[%s245 + $0x3a0] sm:$0xff]
        %v411 = vld [vmem:[%s245 + $0x3a8] sm:$0xff]
        %v412 = vld [vmem:[%s245 + $0x3b0] sm:$0xff]
        %v413 = vld [vmem:[%s245 + $0x3b8] sm:$0xff]
        %v414 = vld [vmem:[%s245 + $0x3c0] sm:$0xff]
        %v415 = vld [vmem:[%s245 + $0x3c8] sm:$0xff]
        %v416 = vld [vmem:[%s245 + $0x3d0] sm:$0xff]
        %v417 = vld [vmem:[%s245 + $0x3d8] sm:$0xff]
        %v418 = vld [vmem:[%s245 + $0x3e0] sm:$0xff]
        %v419 = vld [vmem:[%s245 + $0x3e8] sm:$0xff]
        %v420 = vld [vmem:[%s245 + $0x3f0] sm:$0xff]
        %v421 = vld [vmem:[%s245 + $0x3f8] sm:$0xff]
        %v424 = vunpack.c.l.b16 %v292
        %v425 = vunpack.c.h.b16 %v292
        %v426 = vunpack.c.l.b16 %v293
        %v427 = vunpack.c.h.b16 %v293
        %v428 = vpack.c.b16 %v426, %v424
        %v429 = vpack.c.b16 %v427, %v425
        %v560 = vunpack.c.l.b16 %v294
        %v561 = vunpack.c.h.b16 %v294
        %v562 = vunpack.c.l.b16 %v295
        %v563 = vunpack.c.h.b16 %v295
        %v564 = vunpack.c.l.b16 %v296
        %v565 = vunpack.c.h.b16 %v296
        %v566 = vunpack.c.l.b16 %v297
        %v567 = vunpack.c.h.b16 %v297
        %v568 = vunpack.c.l.b16 %v298
        %v569 = vunpack.c.h.b16 %v298
        %v570 = vunpack.c.l.b16 %v299
        %v571 = vunpack.c.h.b16 %v299
        %v572 = vunpack.c.l.b16 %v300
        %v573 = vunpack.c.h.b16 %v300
        %v574 = vunpack.c.l.b16 %v301
        %v575 = vunpack.c.h.b16 %v301
        %v576 = vunpack.c.l.b16 %v302
        %v577 = vunpack.c.h.b16 %v302
        %v578 = vunpack.c.l.b16 %v303
        %v579 = vunpack.c.h.b16 %v303
        %v580 = vunpack.c.l.b16 %v304
        %v581 = vunpack.c.h.b16 %v304
        %v582 = vunpack.c.l.b16 %v305
        %v583 = vunpack.c.h.b16 %v305
        %v584 = vunpack.c.l.b16 %v306
        %v585 = vunpack.c.h.b16 %v306
        %v586 = vunpack.c.l.b16 %v307
        %v587 = vunpack.c.h.b16 %v307
        %v588 = vunpack.c.l.b16 %v308
        %v589 = vunpack.c.h.b16 %v308
        %v590 = vunpack.c.l.b16 %v309
        %v591 = vunpack.c.h.b16 %v309
        %v592 = vunpack.c.l.b16 %v310
        %v593 = vunpack.c.h.b16 %v310
        %v594 = vunpack.c.l.b16 %v311
        %v595 = vunpack.c.h.b16 %v311
        %v596 = vunpack.c.l.b16 %v312
        %v597 = vunpack.c.h.b16 %v312
        %v598 = vunpack.c.l.b16 %v313
        %v599 = vunpack.c.h.b16 %v313
        %v600 = vunpack.c.l.b16 %v314
        %v601 = vunpack.c.h.b16 %v314
        %v602 = vunpack.c.l.b16 %v315
        %v603 = vunpack.c.h.b16 %v315
        %v604 = vunpack.c.l.b16 %v316
        %v605 = vunpack.c.h.b16 %v316
        %v606 = vunpack.c.l.b16 %v317
        %v607 = vunpack.c.h.b16 %v317
        %v608 = vunpack.c.l.b16 %v318
        %v609 = vunpack.c.h.b16 %v318
        %v610 = vunpack.c.l.b16 %v319
        %v611 = vunpack.c.h.b16 %v319
        %v612 = vunpack.c.l.b16 %v320
        %v613 = vunpack.c.h.b16 %v320
        %v614 = vunpack.c.l.b16 %v321
        %v615 = vunpack.c.h.b16 %v321
        %v616 = vunpack.c.l.b16 %v322
        %v617 = vunpack.c.h.b16 %v322
        %v618 = vunpack.c.l.b16 %v323
        %v619 = vunpack.c.h.b16 %v323
        %v620 = vunpack.c.l.b16 %v324
        %v621 = vunpack.c.h.b16 %v324
        %v622 = vunpack.c.l.b16 %v325
        %v623 = vunpack.c.h.b16 %v325
        %v624 = vunpack.c.l.b16 %v326
        %v625 = vunpack.c.h.b16 %v326
        %v626 = vunpack.c.l.b16 %v327
        %v627 = vunpack.c.h.b16 %v327
        %v628 = vunpack.c.l.b16 %v328
        %v629 = vunpack.c.h.b16 %v328
        %v630 = vunpack.c.l.b16 %v329
        %v631 = vunpack.c.h.b16 %v329
        %v632 = vunpack.c.l.b16 %v330
        %v633 = vunpack.c.h.b16 %v330
        %v634 = vunpack.c.l.b16 %v331
        %v635 = vunpack.c.h.b16 %v331
        %v636 = vunpack.c.l.b16 %v332
        %v637 = vunpack.c.h.b16 %v332
        %v638 = vunpack.c.l.b16 %v333
        %v639 = vunpack.c.h.b16 %v333
        %v640 = vunpack.c.l.b16 %v334
        %v641 = vunpack.c.h.b16 %v334
        %v642 = vunpack.c.l.b16 %v335
        %v643 = vunpack.c.h.b16 %v335
        %v644 = vunpack.c.l.b16 %v336
        %v645 = vunpack.c.h.b16 %v336
        %v646 = vunpack.c.l.b16 %v337
        %v647 = vunpack.c.h.b16 %v337
        %v648 = vunpack.c.l.b16 %v338
        %v649 = vunpack.c.h.b16 %v338
        %v650 = vunpack.c.l.b16 %v339
        %v651 = vunpack.c.h.b16 %v339
        %v652 = vunpack.c.l.b16 %v340
        %v653 = vunpack.c.h.b16 %v340
        %v654 = vunpack.c.l.b16 %v341
        %v655 = vunpack.c.h.b16 %v341
        %v656 = vunpack.c.l.b16 %v342
        %v657 = vunpack.c.h.b16 %v342
        %v658 = vunpack.c.l.b16 %v343
        %v659 = vunpack.c.h.b16 %v343
        %v660 = vunpack.c.l.b16 %v344
        %v661 = vunpack.c.h.b16 %v344
        %v662 = vunpack.c.l.b16 %v345
        %v663 = vunpack.c.h.b16 %v345
        %v664 = vunpack.c.l.b16 %v346
        %v665 = vunpack.c.h.b16 %v346
        %v666 = vunpack.c.l.b16 %v347
        %v667 = vunpack.c.h.b16 %v347
        %v668 = vunpack.c.l.b16 %v348
        %v669 = vunpack.c.h.b16 %v348
        %v670 = vunpack.c.l.b16 %v349
        %v671 = vunpack.c.h.b16 %v349
        %v672 = vunpack.c.l.b16 %v350
        %v673 = vunpack.c.h.b16 %v350
        %v674 = vunpack.c.l.b16 %v351
        %v675 = vunpack.c.h.b16 %v351
        %v676 = vunpack.c.l.b16 %v352
        %v677 = vunpack.c.h.b16 %v352
        %v678 = vunpack.c.l.b16 %v353
        %v679 = vunpack.c.h.b16 %v353
        %v680 = vunpack.c.l.b16 %v354
        %v681 = vunpack.c.h.b16 %v354
        %v682 = vunpack.c.l.b16 %v355
        %v683 = vunpack.c.h.b16 %v355
        %v684 = vunpack.c.l.b16 %v356
        %v685 = vunpack.c.h.b16 %v356
        %v686 = vunpack.c.l.b16 %v357
        %v687 = vunpack.c.h.b16 %v357
        %v688 = vunpack.c.l.b16 %v358
        %v689 = vunpack.c.h.b16 %v358
        %v690 = vunpack.c.l.b16 %v359
        %v691 = vunpack.c.h.b16 %v359
        %v692 = vunpack.c.l.b16 %v360
        %v693 = vunpack.c.h.b16 %v360
        %v694 = vunpack.c.l.b16 %v361
        %v695 = vunpack.c.h.b16 %v361
        %v696 = vunpack.c.l.b16 %v362
        %v697 = vunpack.c.h.b16 %v362
        %v698 = vunpack.c.l.b16 %v363
        %v699 = vunpack.c.h.b16 %v363
        %v700 = vunpack.c.l.b16 %v364
        %v701 = vunpack.c.h.b16 %v364
        %v702 = vunpack.c.l.b16 %v365
        %v703 = vunpack.c.h.b16 %v365
        %v704 = vunpack.c.l.b16 %v366
        %v705 = vunpack.c.h.b16 %v366
        %v706 = vunpack.c.l.b16 %v367
        %v707 = vunpack.c.h.b16 %v367
        %v708 = vunpack.c.l.b16 %v368
        %v709 = vunpack.c.h.b16 %v368
        %v710 = vunpack.c.l.b16 %v369
        %v711 = vunpack.c.h.b16 %v369
        %v712 = vunpack.c.l.b16 %v370
        %v713 = vunpack.c.h.b16 %v370
        %v714 = vunpack.c.l.b16 %v371
        %v715 = vunpack.c.h.b16 %v371
        %v716 = vunpack.c.l.b16 %v372
        %v717 = vunpack.c.h.b16 %v372
        %v718 = vunpack.c.l.b16 %v373
        %v719 = vunpack.c.h.b16 %v373
        %v720 = vunpack.c.l.b16 %v374
        %v721 = vunpack.c.h.b16 %v374
        %v722 = vunpack.c.l.b16 %v375
        %v723 = vunpack.c.h.b16 %v375
        %v724 = vunpack.c.l.b16 %v376
        %v725 = vunpack.c.h.b16 %v376
        %v726 = vunpack.c.l.b16 %v377
        %v727 = vunpack.c.h.b16 %v377
        %v728 = vunpack.c.l.b16 %v378
        %v729 = vunpack.c.h.b16 %v378
        %v730 = vunpack.c.l.b16 %v379
        %v731 = vunpack.c.h.b16 %v379
        %v732 = vunpack.c.l.b16 %v380
        %v733 = vunpack.c.h.b16 %v380
        %v734 = vunpack.c.l.b16 %v381
        %v735 = vunpack.c.h.b16 %v381
        %v736 = vunpack.c.l.b16 %v382
        %v737 = vunpack.c.h.b16 %v382
        %v738 = vunpack.c.l.b16 %v383
        %v739 = vunpack.c.h.b16 %v383
        %v740 = vunpack.c.l.b16 %v384
        %v741 = vunpack.c.h.b16 %v384
        %v742 = vunpack.c.l.b16 %v385
        %v743 = vunpack.c.h.b16 %v385
        %v744 = vunpack.c.l.b16 %v386
        %v745 = vunpack.c.h.b16 %v386
        %v746 = vunpack.c.l.b16 %v387
        %v747 = vunpack.c.h.b16 %v387
        %v748 = vunpack.c.l.b16 %v388
        %v749 = vunpack.c.h.b16 %v388
        %v750 = vunpack.c.l.b16 %v389
        %v751 = vunpack.c.h.b16 %v389
        %v752 = vunpack.c.l.b16 %v390
        %v753 = vunpack.c.h.b16 %v390
        %v754 = vunpack.c.l.b16 %v391
        %v755 = vunpack.c.h.b16 %v391
        %v756 = vunpack.c.l.b16 %v392
        %v757 = vunpack.c.h.b16 %v392
        %v758 = vunpack.c.l.b16 %v393
        %v759 = vunpack.c.h.b16 %v393
        %v760 = vunpack.c.l.b16 %v394
        %v761 = vunpack.c.h.b16 %v394
        %v762 = vunpack.c.l.b16 %v395
        %v763 = vunpack.c.h.b16 %v395
        %v764 = vunpack.c.l.b16 %v396
        %v765 = vunpack.c.h.b16 %v396
        %v766 = vunpack.c.l.b16 %v397
        %v767 = vunpack.c.h.b16 %v397
        %v768 = vunpack.c.l.b16 %v398
        %v769 = vunpack.c.h.b16 %v398
        %v770 = vunpack.c.l.b16 %v399
        %v771 = vunpack.c.h.b16 %v399
        %v772 = vunpack.c.l.b16 %v400
        %v773 = vunpack.c.h.b16 %v400
        %v774 = vunpack.c.l.b16 %v401
        %v775 = vunpack.c.h.b16 %v401
        %v776 = vunpack.c.l.b16 %v402
        %v777 = vunpack.c.h.b16 %v402
        %v778 = vunpack.c.l.b16 %v403
        %v779 = vunpack.c.h.b16 %v403
        %v780 = vunpack.c.l.b16 %v404
        %v781 = vunpack.c.h.b16 %v404
        %v782 = vunpack.c.l.b16 %v405
        %v783 = vunpack.c.h.b16 %v405
        %v784 = vunpack.c.l.b16 %v406
        %v785 = vunpack.c.h.b16 %v406
        %v786 = vunpack.c.l.b16 %v407
        %v787 = vunpack.c.h.b16 %v407
        %v788 = vunpack.c.l.b16 %v408
        %v789 = vunpack.c.h.b16 %v408
        %v790 = vunpack.c.l.b16 %v409
        %v791 = vunpack.c.h.b16 %v409
        %v792 = vunpack.c.l.b16 %v410
        %v793 = vunpack.c.h.b16 %v410
        %v794 = vunpack.c.l.b16 %v411
        %v795 = vunpack.c.h.b16 %v411
        %v796 = vunpack.c.l.b16 %v412
        %v797 = vunpack.c.h.b16 %v412
        %v798 = vunpack.c.l.b16 %v413
        %v799 = vunpack.c.h.b16 %v413
        %v800 = vunpack.c.l.b16 %v414
        %v801 = vunpack.c.h.b16 %v414
        %v802 = vunpack.c.l.b16 %v415
        %v803 = vunpack.c.h.b16 %v415
        %v804 = vunpack.c.l.b16 %v416
        %v805 = vunpack.c.h.b16 %v416
        %v806 = vunpack.c.l.b16 %v417
        %v807 = vunpack.c.h.b16 %v417
        %v808 = vunpack.c.l.b16 %v418
        %v809 = vunpack.c.h.b16 %v418
        %v810 = vunpack.c.l.b16 %v419
        %v811 = vunpack.c.h.b16 %v419
        %v812 = vunpack.c.l.b16 %v420
        %v813 = vunpack.c.h.b16 %v420
        %v814 = vunpack.c.l.b16 %v421
        %v815 = vunpack.c.h.b16 %v421
        %v816 = vpack.c.b16 %v568, %v560
        %v817 = vpack.c.b16 %v569, %v561
        %v818 = vpack.c.b16 %v570, %v562
        %v819 = vpack.c.b16 %v571, %v563
        %v820 = vpack.c.b16 %v572, %v564
        %v821 = vpack.c.b16 %v573, %v565
        %v822 = vpack.c.b16 %v574, %v566
        %v823 = vpack.c.b16 %v575, %v567
        %v824 = vpack.c.b16 %v584, %v576
        %v825 = vpack.c.b16 %v585, %v577
        %v826 = vpack.c.b16 %v586, %v578
        %v827 = vpack.c.b16 %v587, %v579
        %v828 = vpack.c.b16 %v588, %v580
        %v829 = vpack.c.b16 %v589, %v581
        %v830 = vpack.c.b16 %v590, %v582
        %v831 = vpack.c.b16 %v591, %v583
        %v832 = vpack.c.b16 %v600, %v592
        %v833 = vpack.c.b16 %v601, %v593
        %v834 = vpack.c.b16 %v602, %v594
        %v835 = vpack.c.b16 %v603, %v595
        %v836 = vpack.c.b16 %v604, %v596
        %v837 = vpack.c.b16 %v605, %v597
        %v838 = vpack.c.b16 %v606, %v598
        %v839 = vpack.c.b16 %v607, %v599
        %v840 = vpack.c.b16 %v616, %v608
        %v841 = vpack.c.b16 %v617, %v609
        %v842 = vpack.c.b16 %v618, %v610
        %v843 = vpack.c.b16 %v619, %v611
        %v844 = vpack.c.b16 %v620, %v612
        %v845 = vpack.c.b16 %v621, %v613
        %v846 = vpack.c.b16 %v622, %v614
        %v847 = vpack.c.b16 %v623, %v615
        %v848 = vpack.c.b16 %v632, %v624
        %v849 = vpack.c.b16 %v633, %v625
        %v850 = vpack.c.b16 %v634, %v626
        %v851 = vpack.c.b16 %v635, %v627
        %v852 = vpack.c.b16 %v636, %v628
        %v853 = vpack.c.b16 %v637, %v629
        %v854 = vpack.c.b16 %v638, %v630
        %v855 = vpack.c.b16 %v639, %v631
        %v856 = vpack.c.b16 %v648, %v640
        %v857 = vpack.c.b16 %v649, %v641
        %v858 = vpack.c.b16 %v650, %v642
        %v859 = vpack.c.b16 %v651, %v643
        %v860 = vpack.c.b16 %v652, %v644
        %v861 = vpack.c.b16 %v653, %v645
        %v862 = vpack.c.b16 %v654, %v646
        %v863 = vpack.c.b16 %v655, %v647
        %v864 = vpack.c.b16 %v664, %v656
        %v865 = vpack.c.b16 %v665, %v657
        %v866 = vpack.c.b16 %v666, %v658
        %v867 = vpack.c.b16 %v667, %v659
        %v868 = vpack.c.b16 %v668, %v660
        %v869 = vpack.c.b16 %v669, %v661
        %v870 = vpack.c.b16 %v670, %v662
        %v871 = vpack.c.b16 %v671, %v663
        %v872 = vpack.c.b16 %v680, %v672
        %v873 = vpack.c.b16 %v681, %v673
        %v874 = vpack.c.b16 %v682, %v674
        %v875 = vpack.c.b16 %v683, %v675
        %v876 = vpack.c.b16 %v684, %v676
        %v877 = vpack.c.b16 %v685, %v677
        %v878 = vpack.c.b16 %v686, %v678
        %v879 = vpack.c.b16 %v687, %v679
        %v880 = vpack.c.b16 %v696, %v688
        %v881 = vpack.c.b16 %v697, %v689
        %v882 = vpack.c.b16 %v698, %v690
        %v883 = vpack.c.b16 %v699, %v691
        %v884 = vpack.c.b16 %v700, %v692
        %v885 = vpack.c.b16 %v701, %v693
        %v886 = vpack.c.b16 %v702, %v694
        %v887 = vpack.c.b16 %v703, %v695
        %v888 = vpack.c.b16 %v712, %v704
        %v889 = vpack.c.b16 %v713, %v705
        %v890 = vpack.c.b16 %v714, %v706
        %v891 = vpack.c.b16 %v715, %v707
        %v892 = vpack.c.b16 %v716, %v708
        %v893 = vpack.c.b16 %v717, %v709
        %v894 = vpack.c.b16 %v718, %v710
        %v895 = vpack.c.b16 %v719, %v711
        %v896 = vpack.c.b16 %v728, %v720
        %v897 = vpack.c.b16 %v729, %v721
        %v898 = vpack.c.b16 %v730, %v722
        %v899 = vpack.c.b16 %v731, %v723
        %v900 = vpack.c.b16 %v732, %v724
        %v901 = vpack.c.b16 %v733, %v725
        %v902 = vpack.c.b16 %v734, %v726
        %v903 = vpack.c.b16 %v735, %v727
        %v904 = vpack.c.b16 %v744, %v736
        %v905 = vpack.c.b16 %v745, %v737
        %v906 = vpack.c.b16 %v746, %v738
        %v907 = vpack.c.b16 %v747, %v739
        %v908 = vpack.c.b16 %v748, %v740
        %v909 = vpack.c.b16 %v749, %v741
        %v910 = vpack.c.b16 %v750, %v742
        %v911 = vpack.c.b16 %v751, %v743
        %v912 = vpack.c.b16 %v760, %v752
        %v913 = vpack.c.b16 %v761, %v753
        %v914 = vpack.c.b16 %v762, %v754
        %v915 = vpack.c.b16 %v763, %v755
        %v916 = vpack.c.b16 %v764, %v756
        %v917 = vpack.c.b16 %v765, %v757
        %v918 = vpack.c.b16 %v766, %v758
        %v919 = vpack.c.b16 %v767, %v759
        %v920 = vpack.c.b16 %v776, %v768
        %v921 = vpack.c.b16 %v777, %v769
        %v922 = vpack.c.b16 %v778, %v770
        %v923 = vpack.c.b16 %v779, %v771
        %v924 = vpack.c.b16 %v780, %v772
        %v925 = vpack.c.b16 %v781, %v773
        %v926 = vpack.c.b16 %v782, %v774
        %v927 = vpack.c.b16 %v783, %v775
        %v928 = vpack.c.b16 %v792, %v784
        %v929 = vpack.c.b16 %v793, %v785
        %v930 = vpack.c.b16 %v794, %v786
        %v931 = vpack.c.b16 %v795, %v787
        %v932 = vpack.c.b16 %v796, %v788
        %v933 = vpack.c.b16 %v797, %v789
        %v934 = vpack.c.b16 %v798, %v790
        %v935 = vpack.c.b16 %v799, %v791
        %v936 = vpack.c.b16 %v808, %v800
        %v937 = vpack.c.b16 %v809, %v801
        %v938 = vpack.c.b16 %v810, %v802
        %v939 = vpack.c.b16 %v811, %v803
        %v940 = vpack.c.b16 %v812, %v804
        %v941 = vpack.c.b16 %v813, %v805
        %v942 = vpack.c.b16 %v814, %v806
        %v943 = vpack.c.b16 %v815, %v807
        %1072 = vmatprep.subr.bf16.mxu0 %v817
        %1073 = vmatpush1.bf16.msra.mxu0 %v816
        %1074 = vmatprep.subr.bf16.mxu0 %v825
        %1075 = vmatpush1.bf16.msra.mxu0 %v824
        %1076 = vmatprep.subr.bf16.mxu0 %v833
        %1077 = vmatpush1.bf16.msra.mxu0 %v832
        %1078 = vmatprep.subr.bf16.mxu0 %v841
        %1079 = vmatpush1.bf16.msra.mxu0 %v840
        %1080 = vmatprep.subr.bf16.mxu0 %v849
        %1081 = vmatpush1.bf16.msra.mxu0 %v848
        %1082 = vmatprep.subr.bf16.mxu0 %v857
        %1083 = vmatpush1.bf16.msra.mxu0 %v856
        %1084 = vmatprep.subr.bf16.mxu0 %v865
        %1085 = vmatpush1.bf16.msra.mxu0 %v864
        %1086 = vmatprep.subr.bf16.mxu0 %v873
        %1087 = vmatpush1.bf16.msra.mxu0 %v872
        %1088 = vmatprep.subr.bf16.mxu0 %v881
        %1089 = vmatpush1.bf16.msra.mxu0 %v880
        %1090 = vmatprep.subr.bf16.mxu0 %v889
        %1091 = vmatpush1.bf16.msra.mxu0 %v888
        %1092 = vmatprep.subr.bf16.mxu0 %v897
        %1093 = vmatpush1.bf16.msra.mxu0 %v896
        %1094 = vmatprep.subr.bf16.mxu0 %v905
        %1095 = vmatpush1.bf16.msra.mxu0 %v904
        %1096 = vmatprep.subr.bf16.mxu0 %v913
        %1097 = vmatpush1.bf16.msra.mxu0 %v912
        %1098 = vmatprep.subr.bf16.mxu0 %v921
        %1099 = vmatpush1.bf16.msra.mxu0 %v920
        %1100 = vmatprep.subr.bf16.mxu0 %v929
        %1101 = vmatpush1.bf16.msra.mxu0 %v928
        %1102 = vmatprep.subr.bf16.mxu0 %v937
        %1103 = vmatpush1.bf16.msra.mxu0 %v936
        %1104 = vmatprep.mubr.bf16.mxu0 %v429
        %1105 = vmatmul.mubr.bf16.gmra.mrb[0].mxu0 %v428
        %v1106 = vpop.f32.mrb[0].mxu0
        %v1107 = vadd.f32 0.0, %v1106
        %v1108 = vpop.f32.mrb[0].mxu0
        %v1109 = vadd.f32 0.0, %v1108
        %v1110 = vpop.f32.mrb[0].mxu0
        %v1111 = vadd.f32 0.0, %v1110
        %v1112 = vpop.f32.mrb[0].mxu0
        %v1113 = vadd.f32 0.0, %v1112
        %1114 = vdwg.mxu0
        %1115 = vmatprep.subr.bf16.mxu0 %v819
        %1116 = vmatpush1.bf16.msra.mxu0 %v818
        %1117 = vmatprep.subr.bf16.mxu0 %v827
        %1118 = vmatpush1.bf16.msra.mxu0 %v826
        %1119 = vmatprep.subr.bf16.mxu0 %v835
        %1120 = vmatpush1.bf16.msra.mxu0 %v834
        %1121 = vmatprep.subr.bf16.mxu0 %v843
        %1122 = vmatpush1.bf16.msra.mxu0 %v842
        %1123 = vmatprep.subr.bf16.mxu0 %v851
        %1124 = vmatpush1.bf16.msra.mxu0 %v850
        %1125 = vmatprep.subr.bf16.mxu0 %v859
        %1126 = vmatpush1.bf16.msra.mxu0 %v858
        %1127 = vmatprep.subr.bf16.mxu0 %v867
        %1128 = vmatpush1.bf16.msra.mxu0 %v866
        %1129 = vmatprep.subr.bf16.mxu0 %v875
        %1130 = vmatpush1.bf16.msra.mxu0 %v874
        %1131 = vmatprep.subr.bf16.mxu0 %v883
        %1132 = vmatpush1.bf16.msra.mxu0 %v882
        %1133 = vmatprep.subr.bf16.mxu0 %v891
        %1134 = vmatpush1.bf16.msra.mxu0 %v890
        %1135 = vmatprep.subr.bf16.mxu0 %v899
        %1136 = vmatpush1.bf16.msra.mxu0 %v898
        %1137 = vmatprep.subr.bf16.mxu0 %v907
        %1138 = vmatpush1.bf16.msra.mxu0 %v906
        %1139 = vmatprep.subr.bf16.mxu0 %v915
        %1140 = vmatpush1.bf16.msra.mxu0 %v914
        %1141 = vmatprep.subr.bf16.mxu0 %v923
        %1142 = vmatpush1.bf16.msra.mxu0 %v922
        %1143 = vmatprep.subr.bf16.mxu0 %v931
        %1144 = vmatpush1.bf16.msra.mxu0 %v930
        %1145 = vmatprep.subr.bf16.mxu0 %v939
        %1146 = vmatpush1.bf16.msra.mxu0 %v938
        %1147 = vmatprep.mubr.bf16.mxu0 %v429
        %1148 = vmatmul.mubr.bf16.gmra.mrb[0].mxu0 %v428
        %v1149 = vpop.f32.mrb[0].mxu0
        %v1150 = vadd.f32 0.0, %v1149
        %v1151 = vpop.f32.mrb[0].mxu0
        %v1152 = vadd.f32 0.0, %v1151
        %v1153 = vpop.f32.mrb[0].mxu0
        %v1154 = vadd.f32 0.0, %v1153
        %v1155 = vpop.f32.mrb[0].mxu0
        %v1156 = vadd.f32 0.0, %v1155
        %1157 = vdwg.mxu0
        %1158 = vmatprep.subr.bf16.mxu0 %v821
        %1159 = vmatpush1.bf16.msra.mxu0 %v820
        %1160 = vmatprep.subr.bf16.mxu0 %v829
        %1161 = vmatpush1.bf16.msra.mxu0 %v828
        %1162 = vmatprep.subr.bf16.mxu0 %v837
        %1163 = vmatpush1.bf16.msra.mxu0 %v836
        %1164 = vmatprep.subr.bf16.mxu0 %v845
        %1165 = vmatpush1.bf16.msra.mxu0 %v844
        %1166 = vmatprep.subr.bf16.mxu0 %v853
        %1167 = vmatpush1.bf16.msra.mxu0 %v852
        %1168 = vmatprep.subr.bf16.mxu0 %v861
        %1169 = vmatpush1.bf16.msra.mxu0 %v860
        %1170 = vmatprep.subr.bf16.mxu0 %v869
        %1171 = vmatpush1.bf16.msra.mxu0 %v868
        %1172 = vmatprep.subr.bf16.mxu0 %v877
        %1173 = vmatpush1.bf16.msra.mxu0 %v876
        %1174 = vmatprep.subr.bf16.mxu0 %v885
        %1175 = vmatpush1.bf16.msra.mxu0 %v884
        %1176 = vmatprep.subr.bf16.mxu0 %v893
        %1177 = vmatpush1.bf16.msra.mxu0 %v892
        %1178 = vmatprep.subr.bf16.mxu0 %v901
        %1179 = vmatpush1.bf16.msra.mxu0 %v900
        %1180 = vmatprep.subr.bf16.mxu0 %v909
        %1181 = vmatpush1.bf16.msra.mxu0 %v908
        %1182 = vmatprep.subr.bf16.mxu0 %v917
        %1183 = vmatpush1.bf16.msra.mxu0 %v916
        %1184 = vmatprep.subr.bf16.mxu0 %v925
        %1185 = vmatpush1.bf16.msra.mxu0 %v924
        %1186 = vmatprep.subr.bf16.mxu0 %v933
        %1187 = vmatpush1.bf16.msra.mxu0 %v932
        %1188 = vmatprep.subr.bf16.mxu0 %v941
        %1189 = vmatpush1.bf16.msra.mxu0 %v940
        %1190 = vmatprep.mubr.bf16.mxu0 %v429
        %1191 = vmatmul.mubr.bf16.gmra.mrb[0].mxu0 %v428
        %v1192 = vpop.f32.mrb[0].mxu0
        %v1193 = vadd.f32 0.0, %v1192
        %v1194 = vpop.f32.mrb[0].mxu0
        %v1195 = vadd.f32 0.0, %v1194
        %v1196 = vpop.f32.mrb[0].mxu0
        %v1197 = vadd.f32 0.0, %v1196
        %v1198 = vpop.f32.mrb[0].mxu0
        %v1199 = vadd.f32 0.0, %v1198
        %1200 = vdwg.mxu0
        %1201 = vmatprep.subr.bf16.mxu0 %v823
        %1202 = vmatpush1.bf16.msra.mxu0 %v822
        %1203 = vmatprep.subr.bf16.mxu0 %v831
        %1204 = vmatpush1.bf16.msra.mxu0 %v830
        %1205 = vmatprep.subr.bf16.mxu0 %v839
        %1206 = vmatpush1.bf16.msra.mxu0 %v838
        %1207 = vmatprep.subr.bf16.mxu0 %v847
        %1208 = vmatpush1.bf16.msra.mxu0 %v846
        %1209 = vmatprep.subr.bf16.mxu0 %v855
        %1210 = vmatpush1.bf16.msra.mxu0 %v854
        %1211 = vmatprep.subr.bf16.mxu0 %v863
        %1212 = vmatpush1.bf16.msra.mxu0 %v862
        %1213 = vmatprep.subr.bf16.mxu0 %v871
        %1214 = vmatpush1.bf16.msra.mxu0 %v870
        %1215 = vmatprep.subr.bf16.mxu0 %v879
        %1216 = vmatpush1.bf16.msra.mxu0 %v878
        %1217 = vmatprep.subr.bf16.mxu0 %v887
        %1218 = vmatpush1.bf16.msra.mxu0 %v886
        %1219 = vmatprep.subr.bf16.mxu0 %v895
        %1220 = vmatpush1.bf16.msra.mxu0 %v894
        %1221 = vmatprep.subr.bf16.mxu0 %v903
        %1222 = vmatpush1.bf16.msra.mxu0 %v902
        %1223 = vmatprep.subr.bf16.mxu0 %v911
        %1224 = vmatpush1.bf16.msra.mxu0 %v910
        %1225 = vmatprep.subr.bf16.mxu0 %v919
        %1226 = vmatpush1.bf16.msra.mxu0 %v918
        %1227 = vmatprep.subr.bf16.mxu0 %v927
        %1228 = vmatpush1.bf16.msra.mxu0 %v926
        %1229 = vmatprep.subr.bf16.mxu0 %v935
        %1230 = vmatpush1.bf16.msra.mxu0 %v934
        %1231 = vmatprep.subr.bf16.mxu0 %v943
        %1232 = vmatpush1.bf16.msra.mxu0 %v942
        %1233 = vmatprep.mubr.bf16.mxu0 %v429
        %1234 = vmatmul.mubr.bf16.gmra.mrb[0].mxu0 %v428
        %v1235 = vpop.f32.mrb[0].mxu0
        %v1236 = vadd.f32 0.0, %v1235
        %v1237 = vpop.f32.mrb[0].mxu0
        %v1238 = vadd.f32 0.0, %v1237
        %v1239 = vpop.f32.mrb[0].mxu0
        %v1240 = vadd.f32 0.0, %v1239
        %v1241 = vpop.f32.mrb[0].mxu0
        %v1242 = vadd.f32 0.0, %v1241
        %1243 = vdwg.mxu0
        %v1244 = vxor.u32 %v1107, 2147483648
        %v1245 = vxor.u32 %v1109, 2147483648
        %v1246 = vxor.u32 %v1150, 2147483648
        %v1247 = vxor.u32 %v1152, 2147483648
        %v1248 = vxor.u32 %v1111, 2147483648
        %v1249 = vxor.u32 %v1113, 2147483648
        %v1250 = vxor.u32 %v1154, 2147483648
        %v1251 = vxor.u32 %v1156, 2147483648
        %v1252 = vmul.f32 %v1244, 1.442695
        %v1253 = vpow.pop %v1252
        %v1254 = vmul.f32 %v1245, 1.442695
        %v1255 = vpow.pop %v1254
        %v1256 = vmul.f32 %v1246, 1.442695
        %v1257 = vpow.pop %v1256
        %v1258 = vmul.f32 %v1247, 1.442695
        %v1259 = vpow.pop %v1258
        %v1260 = vmul.f32 %v1248, 1.442695
        %v1261 = vpow.pop %v1260
        %v1262 = vmul.f32 %v1249, 1.442695
        %v1263 = vpow.pop %v1262
        %v1264 = vmul.f32 %v1250, 1.442695
        %v1265 = vpow.pop %v1264
        %v1266 = vmul.f32 %v1251, 1.442695
        %v1267 = vpow.pop %v1266
        %v1268 = vadd.f32 %v1253, 1.0
        %v1269 = vadd.f32 %v1255, 1.0
        %v1270 = vadd.f32 %v1257, 1.0
        %v1271 = vadd.f32 %v1259, 1.0
        %v1272 = vadd.f32 %v1261, 1.0
        %v1273 = vadd.f32 %v1263, 1.0
        %v1274 = vadd.f32 %v1265, 1.0
        %v1275 = vadd.f32 %v1267, 1.0
        %v1276 = vrcp.pop %v1268
        %v1277 = vmul.f32 1.0, %v1276
        %v1278 = vrcp.pop %v1269
        %v1279 = vmul.f32 1.0, %v1278
        %v1280 = vrcp.pop %v1270
        %v1281 = vmul.f32 1.0, %v1280
        %v1282 = vrcp.pop %v1271
        %v1283 = vmul.f32 1.0, %v1282
        %v1284 = vrcp.pop %v1272
        %v1285 = vmul.f32 1.0, %v1284
        %v1286 = vrcp.pop %v1273
        %v1287 = vmul.f32 1.0, %v1286
        %v1288 = vrcp.pop %v1274
        %v1289 = vmul.f32 1.0, %v1288
        %v1290 = vrcp.pop %v1275
        %v1291 = vmul.f32 1.0, %v1290
        %v1292 = vmul.f32 %v1107, %v1277
        %v1293 = vmul.f32 %v1109, %v1279
        %v1294 = vmul.f32 %v1150, %v1281
        %v1295 = vmul.f32 %v1152, %v1283
        %v1296 = vmul.f32 %v1111, %v1285
        %v1297 = vmul.f32 %v1113, %v1287
        %v1298 = vmul.f32 %v1154, %v1289
        %v1299 = vmul.f32 %v1156, %v1291
        %v1300 = vmul.f32 %v1292, %v1193
        %v1301 = vmul.f32 %v1293, %v1195
        %v1302 = vmul.f32 %v1294, %v1236
        %v1303 = vmul.f32 %v1295, %v1238
        %v1304 = vmul.f32 %v1296, %v1197
        %v1305 = vmul.f32 %v1297, %v1199
        %v1306 = vmul.f32 %v1298, %v1240
        %v1307 = vmul.f32 %v1299, %v1242
        %v1308 = vld [vmem:[#allocation2] sm:$0xff]
        %v1309 = vld [vmem:[#allocation2 + $0x8] sm:$0xff]
        %v1310 = vld [vmem:[#allocation2 + $0x10] sm:$0xff]
        %v1311 = vld [vmem:[#allocation2 + $0x18] sm:$0xff]
        %v1312 = vpack.c.bf16 %v1304, %v1300
        %v1313 = vpack.c.bf16 %v1305, %v1301
        %v1314 = vpack.c.bf16 %v1306, %v1302
        %v1315 = vpack.c.bf16 %v1307, %v1303
        %v1316 = vld [vmem:[%s254] sm:$0xff]
        %v1317 = vld [vmem:[%s254 + $0x8] sm:$0xff]
        %v1318 = vld [vmem:[%s254 + $0x10] sm:$0xff]
        %v1319 = vld [vmem:[%s254 + $0x18] sm:$0xff]
        %v1320 = vld [vmem:[%s254 + $0x20] sm:$0xff]
        %v1321 = vld [vmem:[%s254 + $0x28] sm:$0xff]
        %v1322 = vld [vmem:[%s254 + $0x30] sm:$0xff]
        %v1323 = vld [vmem:[%s254 + $0x38] sm:$0xff]
        %v1324 = vld [vmem:[%s254 + $0x40] sm:$0xff]
        %v1325 = vld [vmem:[%s254 + $0x48] sm:$0xff]
        %v1326 = vld [vmem:[%s254 + $0x50] sm:$0xff]
        %v1327 = vld [vmem:[%s254 + $0x58] sm:$0xff]
        %v1328 = vld [vmem:[%s254 + $0x60] sm:$0xff]
        %v1329 = vld [vmem:[%s254 + $0x68] sm:$0xff]
        %v1330 = vld [vmem:[%s254 + $0x70] sm:$0xff]
        %v1331 = vld [vmem:[%s254 + $0x78] sm:$0xff]
        %v1332 = vld [vmem:[%s254 + $0x80] sm:$0xff]
        %v1333 = vld [vmem:[%s254 + $0x88] sm:$0xff]
        %v1334 = vld [vmem:[%s254 + $0x90] sm:$0xff]
        %v1335 = vld [vmem:[%s254 + $0x98] sm:$0xff]
        %v1336 = vld [vmem:[%s254 + $0xa0] sm:$0xff]
        %v1337 = vld [vmem:[%s254 + $0xa8] sm:$0xff]
        %v1338 = vld [vmem:[%s254 + $0xb0] sm:$0xff]
        %v1339 = vld [vmem:[%s254 + $0xb8] sm:$0xff]
        %v1340 = vld [vmem:[%s254 + $0xc0] sm:$0xff]
        %v1341 = vld [vmem:[%s254 + $0xc8] sm:$0xff]
        %v1342 = vld [vmem:[%s254 + $0xd0] sm:$0xff]
        %v1343 = vld [vmem:[%s254 + $0xd8] sm:$0xff]
        %v1344 = vld [vmem:[%s254 + $0xe0] sm:$0xff]
        %v1345 = vld [vmem:[%s254 + $0xe8] sm:$0xff]
        %v1346 = vld [vmem:[%s254 + $0xf0] sm:$0xff]
        %v1347 = vld [vmem:[%s254 + $0xf8] sm:$0xff]
        %v1348 = vld [vmem:[%s254 + $0x100] sm:$0xff]
        %v1349 = vld [vmem:[%s254 + $0x108] sm:$0xff]
        %v1350 = vld [vmem:[%s254 + $0x110] sm:$0xff]
        %v1351 = vld [vmem:[%s254 + $0x118] sm:$0xff]
        %v1352 = vld [vmem:[%s254 + $0x120] sm:$0xff]
        %v1353 = vld [vmem:[%s254 + $0x128] sm:$0xff]
        %v1354 = vld [vmem:[%s254 + $0x130] sm:$0xff]
        %v1355 = vld [vmem:[%s254 + $0x138] sm:$0xff]
        %v1356 = vld [vmem:[%s254 + $0x140] sm:$0xff]
        %v1357 = vld [vmem:[%s254 + $0x148] sm:$0xff]
        %v1358 = vld [vmem:[%s254 + $0x150] sm:$0xff]
        %v1359 = vld [vmem:[%s254 + $0x158] sm:$0xff]
        %v1360 = vld [vmem:[%s254 + $0x160] sm:$0xff]
        %v1361 = vld [vmem:[%s254 + $0x168] sm:$0xff]
        %v1362 = vld [vmem:[%s254 + $0x170] sm:$0xff]
        %v1363 = vld [vmem:[%s254 + $0x178] sm:$0xff]
        %v1364 = vld [vmem:[%s254 + $0x180] sm:$0xff]
        %v1365 = vld [vmem:[%s254 + $0x188] sm:$0xff]
        %v1366 = vld [vmem:[%s254 + $0x190] sm:$0xff]
        %v1367 = vld [vmem:[%s254 + $0x198] sm:$0xff]
        %v1368 = vld [vmem:[%s254 + $0x1a0] sm:$0xff]
        %v1369 = vld [vmem:[%s254 + $0x1a8] sm:$0xff]
        %v1370 = vld [vmem:[%s254 + $0x1b0] sm:$0xff]
        %v1371 = vld [vmem:[%s254 + $0x1b8] sm:$0xff]
        %v1372 = vld [vmem:[%s254 + $0x1c0] sm:$0xff]
        %v1373 = vld [vmem:[%s254 + $0x1c8] sm:$0xff]
        %v1374 = vld [vmem:[%s254 + $0x1d0] sm:$0xff]
        %v1375 = vld [vmem:[%s254 + $0x1d8] sm:$0xff]
        %v1376 = vld [vmem:[%s254 + $0x1e0] sm:$0xff]
        %v1377 = vld [vmem:[%s254 + $0x1e8] sm:$0xff]
        %v1378 = vld [vmem:[%s254 + $0x1f0] sm:$0xff]
        %v1379 = vld [vmem:[%s254 + $0x1f8] sm:$0xff]
        %v1444 = vunpack.c.l.b16 %v1316
        %v1445 = vunpack.c.h.b16 %v1316
        %v1446 = vunpack.c.l.b16 %v1317
        %v1447 = vunpack.c.h.b16 %v1317
        %v1448 = vunpack.c.l.b16 %v1318
        %v1449 = vunpack.c.h.b16 %v1318
        %v1450 = vunpack.c.l.b16 %v1319
        %v1451 = vunpack.c.h.b16 %v1319
        %v1452 = vunpack.c.l.b16 %v1320
        %v1453 = vunpack.c.h.b16 %v1320
        %v1454 = vunpack.c.l.b16 %v1321
        %v1455 = vunpack.c.h.b16 %v1321
        %v1456 = vunpack.c.l.b16 %v1322
        %v1457 = vunpack.c.h.b16 %v1322
        %v1458 = vunpack.c.l.b16 %v1323
        %v1459 = vunpack.c.h.b16 %v1323
        %v1460 = vunpack.c.l.b16 %v1324
        %v1461 = vunpack.c.h.b16 %v1324
        %v1462 = vunpack.c.l.b16 %v1325
        %v1463 = vunpack.c.h.b16 %v1325
        %v1464 = vunpack.c.l.b16 %v1326
        %v1465 = vunpack.c.h.b16 %v1326
        %v1466 = vunpack.c.l.b16 %v1327
        %v1467 = vunpack.c.h.b16 %v1327
        %v1468 = vunpack.c.l.b16 %v1328
        %v1469 = vunpack.c.h.b16 %v1328
        %v1470 = vunpack.c.l.b16 %v1329
        %v1471 = vunpack.c.h.b16 %v1329
        %v1472 = vunpack.c.l.b16 %v1330
        %v1473 = vunpack.c.h.b16 %v1330
        %v1474 = vunpack.c.l.b16 %v1331
        %v1475 = vunpack.c.h.b16 %v1331
        %v1476 = vunpack.c.l.b16 %v1332
        %v1477 = vunpack.c.h.b16 %v1332
        %v1478 = vunpack.c.l.b16 %v1333
        %v1479 = vunpack.c.h.b16 %v1333
        %v1480 = vunpack.c.l.b16 %v1334
        %v1481 = vunpack.c.h.b16 %v1334
        %v1482 = vunpack.c.l.b16 %v1335
        %v1483 = vunpack.c.h.b16 %v1335
        %v1484 = vunpack.c.l.b16 %v1336
        %v1485 = vunpack.c.h.b16 %v1336
        %v1486 = vunpack.c.l.b16 %v1337
        %v1487 = vunpack.c.h.b16 %v1337
        %v1488 = vunpack.c.l.b16 %v1338
        %v1489 = vunpack.c.h.b16 %v1338
        %v1490 = vunpack.c.l.b16 %v1339
        %v1491 = vunpack.c.h.b16 %v1339
        %v1492 = vunpack.c.l.b16 %v1340
        %v1493 = vunpack.c.h.b16 %v1340
        %v1494 = vunpack.c.l.b16 %v1341
        %v1495 = vunpack.c.h.b16 %v1341
        %v1496 = vunpack.c.l.b16 %v1342
        %v1497 = vunpack.c.h.b16 %v1342
        %v1498 = vunpack.c.l.b16 %v1343
        %v1499 = vunpack.c.h.b16 %v1343
        %v1500 = vunpack.c.l.b16 %v1344
        %v1501 = vunpack.c.h.b16 %v1344
        %v1502 = vunpack.c.l.b16 %v1345
        %v1503 = vunpack.c.h.b16 %v1345
        %v1504 = vunpack.c.l.b16 %v1346
        %v1505 = vunpack.c.h.b16 %v1346
        %v1506 = vunpack.c.l.b16 %v1347
        %v1507 = vunpack.c.h.b16 %v1347
        %v1508 = vunpack.c.l.b16 %v1348
        %v1509 = vunpack.c.h.b16 %v1348
        %v1510 = vunpack.c.l.b16 %v1349
        %v1511 = vunpack.c.h.b16 %v1349
        %v1512 = vunpack.c.l.b16 %v1350
        %v1513 = vunpack.c.h.b16 %v1350
        %v1514 = vunpack.c.l.b16 %v1351
        %v1515 = vunpack.c.h.b16 %v1351
        %v1516 = vunpack.c.l.b16 %v1352
        %v1517 = vunpack.c.h.b16 %v1352
        %v1518 = vunpack.c.l.b16 %v1353
        %v1519 = vunpack.c.h.b16 %v1353
        %v1520 = vunpack.c.l.b16 %v1354
        %v1521 = vunpack.c.h.b16 %v1354
        %v1522 = vunpack.c.l.b16 %v1355
        %v1523 = vunpack.c.h.b16 %v1355
        %v1524 = vunpack.c.l.b16 %v1356
        %v1525 = vunpack.c.h.b16 %v1356
        %v1526 = vunpack.c.l.b16 %v1357
        %v1527 = vunpack.c.h.b16 %v1357
        %v1528 = vunpack.c.l.b16 %v1358
        %v1529 = vunpack.c.h.b16 %v1358
        %v1530 = vunpack.c.l.b16 %v1359
        %v1531 = vunpack.c.h.b16 %v1359
        %v1532 = vunpack.c.l.b16 %v1360
        %v1533 = vunpack.c.h.b16 %v1360
        %v1534 = vunpack.c.l.b16 %v1361
        %v1535 = vunpack.c.h.b16 %v1361
        %v1536 = vunpack.c.l.b16 %v1362
        %v1537 = vunpack.c.h.b16 %v1362
        %v1538 = vunpack.c.l.b16 %v1363
        %v1539 = vunpack.c.h.b16 %v1363
        %v1540 = vunpack.c.l.b16 %v1364
        %v1541 = vunpack.c.h.b16 %v1364
        %v1542 = vunpack.c.l.b16 %v1365
        %v1543 = vunpack.c.h.b16 %v1365
        %v1544 = vunpack.c.l.b16 %v1366
        %v1545 = vunpack.c.h.b16 %v1366
        %v1546 = vunpack.c.l.b16 %v1367
        %v1547 = vunpack.c.h.b16 %v1367
        %v1548 = vunpack.c.l.b16 %v1368
        %v1549 = vunpack.c.h.b16 %v1368
        %v1550 = vunpack.c.l.b16 %v1369
        %v1551 = vunpack.c.h.b16 %v1369
        %v1552 = vunpack.c.l.b16 %v1370
        %v1553 = vunpack.c.h.b16 %v1370
        %v1554 = vunpack.c.l.b16 %v1371
        %v1555 = vunpack.c.h.b16 %v1371
        %v1556 = vunpack.c.l.b16 %v1372
        %v1557 = vunpack.c.h.b16 %v1372
        %v1558 = vunpack.c.l.b16 %v1373
        %v1559 = vunpack.c.h.b16 %v1373
        %v1560 = vunpack.c.l.b16 %v1374
        %v1561 = vunpack.c.h.b16 %v1374
        %v1562 = vunpack.c.l.b16 %v1375
        %v1563 = vunpack.c.h.b16 %v1375
        %v1564 = vunpack.c.l.b16 %v1376
        %v1565 = vunpack.c.h.b16 %v1376
        %v1566 = vunpack.c.l.b16 %v1377
        %v1567 = vunpack.c.h.b16 %v1377
        %v1568 = vunpack.c.l.b16 %v1378
        %v1569 = vunpack.c.h.b16 %v1378
        %v1570 = vunpack.c.l.b16 %v1379
        %v1571 = vunpack.c.h.b16 %v1379
        %v1572 = vpack.c.b16 %v1446, %v1444
        %v1573 = vpack.c.b16 %v1447, %v1445
        %v1574 = vpack.c.b16 %v1450, %v1448
        %v1575 = vpack.c.b16 %v1451, %v1449
        %v1576 = vpack.c.b16 %v1454, %v1452
        %v1577 = vpack.c.b16 %v1455, %v1453
        %v1578 = vpack.c.b16 %v1458, %v1456
        %v1579 = vpack.c.b16 %v1459, %v1457
        %v1580 = vpack.c.b16 %v1462, %v1460
        %v1581 = vpack.c.b16 %v1463, %v1461
        %v1582 = vpack.c.b16 %v1466, %v1464
        %v1583 = vpack.c.b16 %v1467, %v1465
        %v1584 = vpack.c.b16 %v1470, %v1468
        %v1585 = vpack.c.b16 %v1471, %v1469
        %v1586 = vpack.c.b16 %v1474, %v1472
        %v1587 = vpack.c.b16 %v1475, %v1473
        %v1588 = vpack.c.b16 %v1478, %v1476
        %v1589 = vpack.c.b16 %v1479, %v1477
        %v1590 = vpack.c.b16 %v1482, %v1480
        %v1591 = vpack.c.b16 %v1483, %v1481
        %v1592 = vpack.c.b16 %v1486, %v1484
        %v1593 = vpack.c.b16 %v1487, %v1485
        %v1594 = vpack.c.b16 %v1490, %v1488
        %v1595 = vpack.c.b16 %v1491, %v1489
        %v1596 = vpack.c.b16 %v1494, %v1492
        %v1597 = vpack.c.b16 %v1495, %v1493
        %v1598 = vpack.c.b16 %v1498, %v1496
        %v1599 = vpack.c.b16 %v1499, %v1497
        %v1600 = vpack.c.b16 %v1502, %v1500
        %v1601 = vpack.c.b16 %v1503, %v1501
        %v1602 = vpack.c.b16 %v1506, %v1504
        %v1603 = vpack.c.b16 %v1507, %v1505
        %v1604 = vpack.c.b16 %v1510, %v1508
        %v1605 = vpack.c.b16 %v1511, %v1509
        %v1606 = vpack.c.b16 %v1514, %v1512
        %v1607 = vpack.c.b16 %v1515, %v1513
        %v1608 = vpack.c.b16 %v1518, %v1516
        %v1609 = vpack.c.b16 %v1519, %v1517
        %v1610 = vpack.c.b16 %v1522, %v1520
        %v1611 = vpack.c.b16 %v1523, %v1521
        %v1612 = vpack.c.b16 %v1526, %v1524
        %v1613 = vpack.c.b16 %v1527, %v1525
        %v1614 = vpack.c.b16 %v1530, %v1528
        %v1615 = vpack.c.b16 %v1531, %v1529
        %v1616 = vpack.c.b16 %v1534, %v1532
        %v1617 = vpack.c.b16 %v1535, %v1533
        %v1618 = vpack.c.b16 %v1538, %v1536
        %v1619 = vpack.c.b16 %v1539, %v1537
        %v1620 = vpack.c.b16 %v1542, %v1540
        %v1621 = vpack.c.b16 %v1543, %v1541
        %v1622 = vpack.c.b16 %v1546, %v1544
        %v1623 = vpack.c.b16 %v1547, %v1545
        %v1624 = vpack.c.b16 %v1550, %v1548
        %v1625 = vpack.c.b16 %v1551, %v1549
        %v1626 = vpack.c.b16 %v1554, %v1552
        %v1627 = vpack.c.b16 %v1555, %v1553
        %v1628 = vpack.c.b16 %v1558, %v1556
        %v1629 = vpack.c.b16 %v1559, %v1557
        %v1630 = vpack.c.b16 %v1562, %v1560
        %v1631 = vpack.c.b16 %v1563, %v1561
        %v1632 = vpack.c.b16 %v1566, %v1564
        %v1633 = vpack.c.b16 %v1567, %v1565
        %v1634 = vpack.c.b16 %v1570, %v1568
        %v1635 = vpack.c.b16 %v1571, %v1569
        %1700 = vmatprep.subr.bf16.mxu0 %v1573
        %1701 = vmatpush1.bf16.msra.mxu0 %v1572
        %1702 = vmatprep.subr.bf16.mxu0 %v1575
        %1703 = vmatpush1.bf16.msra.mxu0 %v1574
        %1704 = vmatprep.subr.bf16.mxu0 %v1577
        %1705 = vmatpush1.bf16.msra.mxu0 %v1576
        %1706 = vmatprep.subr.bf16.mxu0 %v1579
        %1707 = vmatpush1.bf16.msra.mxu0 %v1578
        %1708 = vmatprep.subr.bf16.mxu0 %v1581
        %1709 = vmatpush1.bf16.msra.mxu0 %v1580
        %1710 = vmatprep.subr.bf16.mxu0 %v1583
        %1711 = vmatpush1.bf16.msra.mxu0 %v1582
        %1712 = vmatprep.subr.bf16.mxu0 %v1585
        %1713 = vmatpush1.bf16.msra.mxu0 %v1584
        %1714 = vmatprep.subr.bf16.mxu0 %v1587
        %1715 = vmatpush1.bf16.msra.mxu0 %v1586
        %1716 = vmatprep.subr.bf16.mxu0 %v1589
        %1717 = vmatpush1.bf16.msra.mxu0 %v1588
        %1718 = vmatprep.subr.bf16.mxu0 %v1591
        %1719 = vmatpush1.bf16.msra.mxu0 %v1590
        %1720 = vmatprep.subr.bf16.mxu0 %v1593
        %1721 = vmatpush1.bf16.msra.mxu0 %v1592
        %1722 = vmatprep.subr.bf16.mxu0 %v1595
        %1723 = vmatpush1.bf16.msra.mxu0 %v1594
        %1724 = vmatprep.subr.bf16.mxu0 %v1597
        %1725 = vmatpush1.bf16.msra.mxu0 %v1596
        %1726 = vmatprep.subr.bf16.mxu0 %v1599
        %1727 = vmatpush1.bf16.msra.mxu0 %v1598
        %1728 = vmatprep.subr.bf16.mxu0 %v1601
        %1729 = vmatpush1.bf16.msra.mxu0 %v1600
        %1730 = vmatprep.subr.bf16.mxu0 %v1603
        %1731 = vmatpush1.bf16.msra.mxu0 %v1602
        %1732 = vmatprep.mubr.bf16.mxu0 %v1313
        %1733 = vmatmul.mubr.bf16.gmra.mrb[0].mxu0 %v1312
        %v1734 = vpop.f32.mrb[0].mxu0
        %v1735 = vadd.f32 0.0, %v1734
        %v1736 = vpop.f32.mrb[0].mxu0
        %v1737 = vadd.f32 0.0, %v1736
        %v1738 = vpop.f32.mrb[0].mxu0
        %v1739 = vadd.f32 0.0, %v1738
        %v1740 = vpop.f32.mrb[0].mxu0
        %v1741 = vadd.f32 0.0, %v1740
        %1742 = vdwg.mxu0
        %1743 = vmatprep.subr.bf16.mxu0 %v1605
        %1744 = vmatpush1.bf16.msra.mxu0 %v1604
        %1745 = vmatprep.subr.bf16.mxu0 %v1607
        %1746 = vmatpush1.bf16.msra.mxu0 %v1606
        %1747 = vmatprep.subr.bf16.mxu0 %v1609
        %1748 = vmatpush1.bf16.msra.mxu0 %v1608
        %1749 = vmatprep.subr.bf16.mxu0 %v1611
        %1750 = vmatpush1.bf16.msra.mxu0 %v1610
        %1751 = vmatprep.subr.bf16.mxu0 %v1613
        %1752 = vmatpush1.bf16.msra.mxu0 %v1612
        %1753 = vmatprep.subr.bf16.mxu0 %v1615
        %1754 = vmatpush1.bf16.msra.mxu0 %v1614
        %1755 = vmatprep.subr.bf16.mxu0 %v1617
        %1756 = vmatpush1.bf16.msra.mxu0 %v1616
        %1757 = vmatprep.subr.bf16.mxu0 %v1619
        %1758 = vmatpush1.bf16.msra.mxu0 %v1618
        %1759 = vmatprep.subr.bf16.mxu0 %v1621
        %1760 = vmatpush1.bf16.msra.mxu0 %v1620
        %1761 = vmatprep.subr.bf16.mxu0 %v1623
        %1762 = vmatpush1.bf16.msra.mxu0 %v1622
        %1763 = vmatprep.subr.bf16.mxu0 %v1625
        %1764 = vmatpush1.bf16.msra.mxu0 %v1624
        %1765 = vmatprep.subr.bf16.mxu0 %v1627
        %1766 = vmatpush1.bf16.msra.mxu0 %v1626
        %1767 = vmatprep.subr.bf16.mxu0 %v1629
        %1768 = vmatpush1.bf16.msra.mxu0 %v1628
        %1769 = vmatprep.subr.bf16.mxu0 %v1631
        %1770 = vmatpush1.bf16.msra.mxu0 %v1630
        %1771 = vmatprep.subr.bf16.mxu0 %v1633
        %1772 = vmatpush1.bf16.msra.mxu0 %v1632
        %1773 = vmatprep.subr.bf16.mxu0 %v1635
        %1774 = vmatpush1.bf16.msra.mxu0 %v1634
        %1775 = vmatprep.mubr.bf16.mxu0 %v1315
        %1776 = vmatmul.mubr.bf16.gmra.mrb[0].mxu0 %v1314
        %v1777 = vpop.f32.mrb[0].mxu0
        %v1778 = vadd.f32 %v1735, %v1777
        %v1779 = vpop.f32.mrb[0].mxu0
        %v1780 = vadd.f32 %v1737, %v1779
        %v1781 = vpop.f32.mrb[0].mxu0
        %v1782 = vadd.f32 %v1739, %v1781
        %v1783 = vpop.f32.mrb[0].mxu0
        %v1784 = vadd.f32 %v1741, %v1783
        %1785 = vdwg.mxu0
        %v1786 = vadd.f32 %v1308, %v1778
        %v1787 = vadd.f32 %v1309, %v1780
        %v1788 = vadd.f32 %v1310, %v1782
        %v1789 = vadd.f32 %v1311, %v1784
        %1790 = vst [vmem:[#allocation2] sm:$0xff] %v1786
        %1791 = vst [vmem:[#allocation2 + $0x8] sm:$0xff] %v1787
        %1792 = vst [vmem:[#allocation2 + $0x10] sm:$0xff] %v1788
        %1793 = vst [vmem:[#allocation2 + $0x18] sm:$0xff] %v1789
        %p1794 = scmp.eq.s32.totalorder %s26, 1
        // Predicated region
        $region49: #{tpu_custom_call.1} parent=31 // pred_check
          %p1795 = pneg %p1794
        $region50: #{tpu_custom_call.1} parent=31 // pred_check_branch
          %1797 = sbr.rel (%p1795) target = $region52
        $region51: #{tpu_custom_call.1} parent=31 // pred_region
          %v1798 = vld [vmem:[#allocation2] sm:$0xff]
          %v1799 = vld [vmem:[#allocation2 + $0x8] sm:$0xff]
          %v1800 = vld [vmem:[#allocation2 + $0x10] sm:$0xff]
          %v1801 = vld [vmem:[#allocation2 + $0x18] sm:$0xff]
          %1802 = vst [vmem:[#allocation9] sm:$0xff] %v1798
          %1803 = vst [vmem:[#allocation9 + $0x8] sm:$0xff] %v1799
          %1804 = vst [vmem:[#allocation9 + $0x10] sm:$0xff] %v1800
          %1805 = vst [vmem:[#allocation9 + $0x18] sm:$0xff] %v1801
        $region52: #{tpu_custom_call.1} parent=31 // pred_fallthru
          _
        // Predicated region
        $region53: #{tpu_custom_call.1} parent=31 // pred_check
          %p1806 = pneg %p144
        $region54: #{tpu_custom_call.1} parent=31 // pred_check_branch
          %1808 = sbr.rel (%p1806) target = $region56
        $region55: #{tpu_custom_call.1} parent=31 // pred_region
          %s1809 = smul.u32 2, %s25
          %s1811 = ssub.s32 512, 512
          %1812 = vsyncadd [#allocation5], %s1811
          %s1813 = smul.addr %s1809, 2
          %s1814 = smul.addr %s24, 4
          %s1815 = sadd.s32 %s1813, %s1814
          %s1816 = smul.addr %s1815, 128
          %s1817 = scalar_lea.hbm %s3, %s1816
          %s1818 = sshll.u32 [#allocation9], 4
          %s1819 = int_to_ptr.vmem [resolvable:$true] %s1818
          %1824 = dma.vmem_to_hbm [thread:$0]  %s1819, 512, %s1817, [#allocation5], 256, 256, 16
        $region56: #{tpu_custom_call.1} parent=31 // pred_fallthru
          _
        // Predicated region
        $region57: #{tpu_custom_call.1} parent=31 // pred_check
          %p1825 = pneg %p144
        $region58: #{tpu_custom_call.1} parent=31 // pred_check_branch
          %1827 = sbr.rel (%p1825) target = $region60
        $region59: #{tpu_custom_call.1} parent=31 // pred_region
          %1828 = dma.done [#allocation5], 512
        $region60: #{tpu_custom_call.1} parent=31 // pred_fallthru
          _
      $region32: #{tpu_custom_call.1} parent=5 // pred_fallthru
        _
      %p1829 = scmp.le.s32.totalorder 2, %s14
      // Predicated region
      $region61: #{tpu_custom_call.1} parent=5 // pred_check
        %p1830 = pneg %p1829
      $region62: #{tpu_custom_call.1} parent=5 // pred_check_branch
        %1832 = sbr.rel (%p1830) target = $region64
      $region63: #{tpu_custom_call.1} parent=5 // pred_region
        %s1833 = ssub.s32 %s14, 2
      $region64: #{tpu_custom_call.1} parent=5 // pred_fallthru
        _
    $region6: #{tpu_custom_call.1} parent=1 // loop_footer
      %s18 = sadd.s32 1, %s14
    $region7: #{tpu_custom_call.1} parent=1 // loop_footer_branch
      %13 = sbr.rel target = $region3
    $region8: #{tpu_custom_call.1} parent=1 // loop_exit
      _
    %1834 = vsyncpa [#allocation4], 1
    %s1835 = scalar_lea.sflag [#allocation4], 1
    %1836 = vsyncpa %s1835, 1
    %1837 = vsyncpa [#allocation7], 1
    %s1838 = scalar_lea.sflag [#allocation7], 1
    %1839 = vsyncpa %s1838, 1
    %1840 = vsyncpa [#allocation5], 1
    %s1841 = scalar_lea.sflag [#allocation5], 1
    %1842 = vsyncpa %s1841, 1

</llo_original>
